<compile_context>
chip_gen: v5e
topology: v5e:2x2
jax: 0.10.0
libtpu: 0.0.40
codegen_flags: <defaults>
</compile_context>

<pallas_src>
import functools

import numpy as np
import jax
import jax.numpy as jnp
from jax import lax
from jax.experimental import pallas as pl
from jax.experimental.pallas import tpu as pltpu


# ---------------------------------------------------------------------------
# Fused decoder-layer kernel.  One grid step == one block of Bb batch elements;
# LN1 -> cross-attn (per-head QKV proj + softmax + per-head out-proj accumulate)
# -> LN2 -> FFN -> LN3 all stay in VMEM; only the final output and the
# head-averaged attention weights go back to HBM.
# ---------------------------------------------------------------------------
def _layer_norm(x, g, b, eps=1e-5):
    mu = jnp.mean(x, axis=-1, keepdims=True)
    xc = x - mu
    var = jnp.mean(xc * xc, axis=-1, keepdims=True)
    return xc * lax.rsqrt(var + eps) * g + b


def _decoder_layer_kernel(
    tgt_ref, mem_ref, qpos_ref, pos_ref,
    wq_ref, wk_ref, wv_ref, bq_ref, bk_ref, bv_ref,
    wo_ref, bo_ref, w1_ref, b1_ref, w2_ref, b2_ref,
    ln1g_ref, ln1b_ref, ln2g_ref, ln2b_ref, ln3g_ref, ln3b_ref,
    out_ref, ws_ref, *, nhead, matmul_dtype):
    f32 = jnp.float32
    Bb, T, E = tgt_ref.shape
    S = mem_ref.shape[1]
    hd = E // nhead
    Mt, Ms = Bb * T, Bb * S
    scale = 1.0 / float(hd) ** 0.5

    def mm(a, b):
        # Plain (M,K)@(K,N) matmul; optional bf16 operands, f32 accumulation.
        if matmul_dtype is not None:
            a = a.astype(matmul_dtype)
            b = b.astype(matmul_dtype)
        return jnp.dot(a, b, preferred_element_type=f32)

    def bmm(eq, a, b):
        if matmul_dtype is not None:
            a = a.astype(matmul_dtype)
            b = b.astype(matmul_dtype)
        return jnp.einsum(eq, a, b, preferred_element_type=f32)

    # Flatten the batch block into the matmul M dimension so every projection /
    # FFN matmul sees Bb*T (or Bb*S) rows instead of T.
    tgt = tgt_ref[...].reshape(Mt, E).astype(f32)
    qpos = qpos_ref[...].reshape(Mt, E).astype(f32)
    mem = mem_ref[...].reshape(Ms, E).astype(f32)
    pos = pos_ref[...].reshape(Ms, E).astype(f32)

    # forward_post: the self-attention output never reaches the output (the
    # source does `tgt = self.norm1(tgt)` with no residual add), so only the
    # LayerNorm survives.
    tgt_n = _layer_norm(tgt, ln1g_ref[...], ln1b_ref[...])

    qx = tgt_n + qpos        # (Mt, E)   query input of cross-attn
    kx = mem + pos           # (Ms, E)   key input of cross-attn

    attn_acc = jnp.zeros((Mt, E), f32)      # out-projection accumulator
    ws_acc = jnp.zeros((Bb, T, S), f32)     # head-summed attention weights

    for h in range(nhead):   # static unroll; per-head data never leaves VMEM
        # Per-head projections straight from per-head weight stacks (free
        # leading-axis ref indexing, no lane slicing, no in-kernel transpose).
        q_h = (mm(qx, wq_ref[h]) + bq_ref[h]) * scale     # (Mt, hd)
        k_h = mm(kx, wk_ref[h]) + bk_ref[h]               # (Ms, hd)
        v_h = mm(mem, wv_ref[h]) + bv_ref[h]              # (Ms, hd)

        q3 = q_h.reshape(Bb, T, hd)
        k3 = k_h.reshape(Bb, S, hd)
        v3 = v_h.reshape(Bb, S, hd)

        # Batched (over Bb) score / PV matmuls for this head.
        s = bmm("btd,bsd->bts", q3, k3)                   # (Bb, T, S)
        m = jnp.max(s, axis=-1, keepdims=True)
        e = jnp.exp(s - m)
        l = jnp.sum(e, axis=-1, keepdims=True)
        p = e * pl.reciprocal(l, approx=False)            # exact recip + mul
        ws_acc = ws_acc + p

        o3 = bmm("bts,bsd->btd", p, v3)                   # (Bb, T, hd)

        # Out-projection decomposed per head and accumulated: replaces the
        # lane-axis concatenate with an MXU matmul (full-E N dim) + VPU add.
        attn_acc = attn_acc + mm(o3.reshape(Mt, hd), wo_ref[h])   # (Mt, E)

    attn = attn_acc + bo_ref[...]

    # tgt = norm2(tgt + tgt2)
    x = _layer_norm(tgt_n + attn, ln2g_ref[...], ln2b_ref[...])

    # FFN: linear2(relu(linear1(x)))   (dropout = identity in eval mode)
    hid = jnp.maximum(mm(x, w1_ref[...]) + b1_ref[...], 0.0)      # (Mt, F)
    ff = mm(hid, w2_ref[...]) + b2_ref[...]                       # (Mt, E)

    # tgt = norm3(tgt + tgt2)
    y = _layer_norm(x + ff, ln3g_ref[...], ln3b_ref[...])

    out_ref[...] = y.reshape(Bb, T, E).astype(out_ref.dtype)
    # Head-averaged weights (PyTorch average_attn_weights=True default).
    ws_ref[...] = (ws_acc * (1.0 / nhead)).astype(ws_ref.dtype)


# ---------------------------------------------------------------------------
# Batch-block sizing: smallest divisor of B whose Bb*T reaches the MXU row
# target (256 covers v6e/v7x, also >=128 for v5e), capped by a conservative
# VMEM budget (fits v7x's 32 MiB scoped default with double-buffered blocks).
# ---------------------------------------------------------------------------
def _block_vmem_bytes(bb, T, S, E, F):
    f = 4
    data_in = 2 * f * bb * (2 * T * E + 2 * S * E)     # double-buffered inputs
    data_out = 2 * f * bb * (T * E + T * S)            # double-buffered outputs
    live = f * bb * (T * F + 3 * T * S + 4 * T * E + 3 * S * E)  # intermediates
    return data_in + data_out + live


def _pick_batch_block(B, T, S, E, F, target_rows=256, budget=20 * 1024 * 1024):
    best = 1
    for bb in range(1, B + 1):
        if B % bb:
            continue
        if bb > 1 and _block_vmem_bytes(bb, T, S, E, F) > budget:
            break
        best = bb
        if bb * T >= target_rows:
            break
    return best


# ---------------------------------------------------------------------------
# Wrapper: one pallas_call for the whole layer, grid over batch blocks.
# ---------------------------------------------------------------------------
def transformer_decoder_layer(tgt, memory, params, nhead, pos=None,
                              query_pos=None, matmul_dtype=None,
                              ws_dtype=jnp.float32):
    """forward_post semantics; returns (out (T,B,E), attn_weights (B,T,S)).

    matmul_dtype: set to jnp.bfloat16 on v6e/v7x for ~2-4x MXU throughput
      (f32 accumulation kept; ~1e-3 relative drift vs the f32 reference).
    ws_dtype: dtype of the attention-weights HBM write (bf16 halves the
      largest output when S is big).
    """
    T, B, E = tgt.shape
    S = memory.shape[0]
    assert E % nhead == 0
    hd = E // nhead
    F = params["w1"].shape[0]

    if query_pos is None:
        query_pos = jnp.zeros_like(tgt)
    if pos is None:
        pos = jnp.zeros_like(memory)

    # Batch-major so the single grid axis is (blocks of) batch.
    # TODO(synk): if the surrounding model can stay batch-major end to end,
    # these four HBM-round-trip transposes (and the output one) disappear.
    tgt_b = jnp.transpose(tgt, (1, 0, 2))
    mem_b = jnp.transpose(memory, (1, 0, 2))
    qpos_b = jnp.transpose(query_pos, (1, 0, 2))
    pos_b = jnp.transpose(pos, (1, 0, 2))

    # ---- one-time host-side weight prep: pre-transposed & pre-split per head
    ca = params["cross_attn"]
    in_w, in_b = ca["in_w"], ca["in_b"]
    wq, wk, wv = in_w[0:E], in_w[E:2 * E], in_w[2 * E:3 * E]
    bq, bk, bv = in_b[0:E], in_b[E:2 * E], in_b[2 * E:3 * E]
    head_w = lambda w: jnp.transpose(w.reshape(nhead, hd, E), (0, 2, 1))  # (H,E,hd)
    head_b = lambda b: b.reshape(nhead, 1, hd)                            # (H,1,hd)
    wq_h, wk_h, wv_h = head_w(wq), head_w(wk), head_w(wv)
    bq_h, bk_h, bv_h = head_b(bq), head_b(bk), head_b(bv)
    wo_h = jnp.transpose(ca["out_w"]).reshape(nhead, hd, E)               # (H,hd,E)
    bo = ca["out_b"].reshape(1, E)
    w1_t = jnp.transpose(params["w1"])        # (E, F)
    w2_t = jnp.transpose(params["w2"])        # (F, E)
    b1 = params["b1"].reshape(1, F)
    b2 = params["b2"].reshape(1, E)
    row = lambda k: params[k].reshape(1, E)

    if matmul_dtype is not None:              # stream weights in matmul dtype
        cast = lambda a: a.astype(matmul_dtype)
        wq_h, wk_h, wv_h, wo_h, w1_t, w2_t = map(
            cast, (wq_h, wk_h, wv_h, wo_h, w1_t, w2_t))

    param_args = (wq_h, wk_h, wv_h, bq_h, bk_h, bv_h, wo_h, bo,
                  w1_t, b1, w2_t, b2,
                  row("ln1_g"), row("ln1_b"), row("ln2_g"), row("ln2_b"),
                  row("ln3_g"), row("ln3_b"))

    Bb = _pick_batch_block(B, T, S, E, F)

    data_specs = [
        pl.BlockSpec((Bb, T, E), lambda b: (b, 0, 0)),   # tgt
        pl.BlockSpec((Bb, S, E), lambda b: (b, 0, 0)),   # memory
        pl.BlockSpec((Bb, T, E), lambda b: (b, 0, 0)),   # query_pos
        pl.BlockSpec((Bb, S, E), lambda b: (b, 0, 0)),   # pos
    ]
    # Constant index maps: parameter blocks never change across the grid.
    param_specs = [pl.BlockSpec(p.shape, lambda b, _z=(0,) * p.ndim: _z)
                   for p in param_args]

    out_b, ws = pl.pallas_call(
        functools.partial(_decoder_layer_kernel, nhead=nhead,
                          matmul_dtype=matmul_dtype),
        grid=(B // Bb,),
        in_specs=data_specs + param_specs,
        out_specs=(
            pl.BlockSpec((Bb, T, E), lambda b: (b, 0, 0)),
            pl.BlockSpec((Bb, T, S), lambda b: (b, 0, 0)),
        ),
        out_shape=(
            jax.ShapeDtypeStruct((B, T, E), tgt.dtype),
            jax.ShapeDtypeStruct((B, T, S), ws_dtype),
        ),
        compiler_params=pltpu.CompilerParams(
            dimension_semantics=("parallel",),   # batch blocks are independent
        ),
    )(tgt_b, mem_b, qpos_b, pos_b, *param_args)

    return jnp.transpose(out_b, (1, 0, 2)), ws


# ---------------------------------------------------------------------------
# Deterministic parameter init (shapes from the module's __init__)
# ---------------------------------------------------------------------------
def init_params(key, d_model, nhead, dim_ff):
    ks = jax.random.split(key, 10)

    def w(k, shape, scale=0.05):
        return (jax.random.normal(k, shape, jnp.float32) * scale).astype(jnp.float32)

    def mha(k):
        k0, k1, k2, k3 = jax.random.split(k, 4)
        return {
            "in_w": w(k0, (3 * d_model, d_model)),
            "in_b": w(k1, (3 * d_model,), 0.02),
            "out_w": w(k2, (d_model, d_model)),
            "out_b": w(k3, (d_model,), 0.02),
        }

    return {
        # self_attn params exist on the module but never reach the output of
        # forward_post (its result is discarded), so the kernel does not use them.
        "self_attn": mha(ks[0]),
        "cross_attn": mha(ks[1]),
        "w1": w(ks[2], (dim_ff, d_model)),
        "b1": w(ks[3], (dim_ff,), 0.02),
        "w2": w(ks[4], (d_model, dim_ff)),
        "b2": w(ks[5], (d_model,), 0.02),
        "ln1_g": jnp.ones((d_model,), jnp.float32),
        "ln1_b": jnp.zeros((d_model,), jnp.float32),
        "ln2_g": jnp.ones((d_model,), jnp.float32),
        "ln2_b": jnp.zeros((d_model,), jnp.float32),
        "ln3_g": jnp.ones((d_model,), jnp.float32),
        "ln3_b": jnp.zeros((d_model,), jnp.float32),
    }


# ---------------------------------------------------------------------------
# Pure-JAX reference of forward_post (for an in-script sanity check).
# ---------------------------------------------------------------------------
def _reference(tgt, memory, params, nhead, pos=None, query_pos=None):
    hp = lax.Precision.HIGHEST
    E = tgt.shape[-1]
    hd = E // nhead
    ca = params["cross_attn"]

    def ln(x, g, b):
        mu = x.mean(-1, keepdims=True)
        var = ((x - mu) ** 2).mean(-1, keepdims=True)
        return (x - mu) / jnp.sqrt(var + 1e-5) * g + b

    tgt_n = ln(tgt, params["ln1_g"], params["ln1_b"])
    q = jnp.einsum("tbe,oe->tbo", tgt_n + query_pos, ca["in_w"][0:E],
                   precision=hp) + ca["in_b"][0:E]
    k = jnp.einsum("sbe,oe->sbo", memory + pos, ca["in_w"][E:2 * E],
                   precision=hp) + ca["in_b"][E:2 * E]
    v = jnp.einsum("sbe,oe->sbo", memory, ca["in_w"][2 * E:3 * E],
                   precision=hp) + ca["in_b"][2 * E:3 * E]
    T, B, _ = q.shape
    S = k.shape[0]
    qh = q.reshape(T, B, nhead, hd).transpose(1, 2, 0, 3)
    kh = k.reshape(S, B, nhead, hd).transpose(1, 2, 0, 3)
    vh = v.reshape(S, B, nhead, hd).transpose(1, 2, 0, 3)
    s = jnp.einsum("bhtd,bhsd->bhts", qh, kh, precision=hp) / jnp.sqrt(float(hd))
    p = jax.nn.softmax(s, axis=-1)
    o = jnp.einsum("bhts,bhsd->bhtd", p, vh, precision=hp)
    o = o.transpose(2, 0, 1, 3).reshape(T, B, E)
    attn = jnp.einsum("tbe,oe->tbo", o, ca["out_w"], precision=hp) + ca["out_b"]
    x = ln(tgt_n + attn, params["ln2_g"], params["ln2_b"])
    hid = jax.nn.relu(jnp.einsum("tbe,fe->tbf", x, params["w1"],
                                 precision=hp) + params["b1"])
    ff = jnp.einsum("tbf,ef->tbe", hid, params["w2"], precision=hp) + params["b2"]
    y = ln(x + ff, params["ln3_g"], params["ln3_b"])
    return y, p.mean(axis=1)


if __name__ == "__main__":
    d_model, nhead, dim_ff = 32, 4, 64
    T, S, B = 8, 8, 2

    key = jax.random.PRNGKey(0)
    k1, k2, k3, k4, kp = jax.random.split(key, 5)
    tgt = jax.random.normal(k1, (T, B, d_model), jnp.float32)
    memory = jax.random.normal(k2, (S, B, d_model), jnp.float32)
    query_pos = jax.random.normal(k3, (T, B, d_model), jnp.float32)
    pos = jax.random.normal(k4, (S, B, d_model), jnp.float32)

    params = init_params(kp, d_model, nhead, dim_ff)

    fwd = jax.jit(functools.partial(transformer_decoder_layer, nhead=nhead))
    out, ws = fwd(tgt, memory, params, pos=pos, query_pos=query_pos)
    jax.block_until_ready((out, ws))
    assert out.shape == (T, B, d_model) and ws.shape == (B, T, S)

    # Loose-tolerance sanity check vs a pure-JAX reference (loose to tolerate
    # MXU precision-mode differences between Pallas and the XLA reference).
    ref_out, ref_ws = jax.jit(functools.partial(_reference, nhead=nhead))(
        tgt, memory, params, pos=pos, query_pos=query_pos)
    np.testing.assert_allclose(np.asarray(out), np.asarray(ref_out),
                               rtol=2e-2, atol=2e-2)
    np.testing.assert_allclose(np.asarray(ws), np.asarray(ref_ws),
                               rtol=2e-2, atol=2e-2)
    print("KERNEL_OK")
</pallas_src>

<mosaic_0001>
module attributes {stable_mosaic.version = 11 : i64} {
  func.func @_decoder_layer_kernel(%arg0: i32, %arg1: memref<2x8x32xf32, #tpu.memory_space<vmem>>, %arg2: memref<2x8x32xf32, #tpu.memory_space<vmem>>, %arg3: memref<2x8x32xf32, #tpu.memory_space<vmem>>, %arg4: memref<2x8x32xf32, #tpu.memory_space<vmem>>, %arg5: memref<4x32x8xf32, #tpu.memory_space<vmem>>, %arg6: memref<4x32x8xf32, #tpu.memory_space<vmem>>, %arg7: memref<4x32x8xf32, #tpu.memory_space<vmem>>, %arg8: memref<4x1x8xf32, #tpu.memory_space<vmem>>, %arg9: memref<4x1x8xf32, #tpu.memory_space<vmem>>, %arg10: memref<4x1x8xf32, #tpu.memory_space<vmem>>, %arg11: memref<4x8x32xf32, #tpu.memory_space<vmem>>, %arg12: memref<1x32xf32, #tpu.memory_space<vmem>>, %arg13: memref<32x64xf32, #tpu.memory_space<vmem>>, %arg14: memref<1x64xf32, #tpu.memory_space<vmem>>, %arg15: memref<64x32xf32, #tpu.memory_space<vmem>>, %arg16: memref<1x32xf32, #tpu.memory_space<vmem>>, %arg17: memref<1x32xf32, #tpu.memory_space<vmem>>, %arg18: memref<1x32xf32, #tpu.memory_space<vmem>>, %arg19: memref<1x32xf32, #tpu.memory_space<vmem>>, %arg20: memref<1x32xf32, #tpu.memory_space<vmem>>, %arg21: memref<1x32xf32, #tpu.memory_space<vmem>>, %arg22: memref<1x32xf32, #tpu.memory_space<vmem>>, %arg23: memref<2x8x32xf32, #tpu.memory_space<vmem>>, %arg24: memref<2x8x8xf32, #tpu.memory_space<vmem>>) attributes {dimension_semantics = [#tpu.dimension_semantics<parallel>], iteration_bounds = array<i64: 1>, scalar_prefetch = 0 : i64, scratch_operands = 0 : i64, tpu.core_type = #tpu.core_type<tc>, window_params = [{transform_indices = @transform_0, window_bounds = array<i64: 2, 8, 32>}, {transform_indices = @transform_1, window_bounds = array<i64: 2, 8, 32>}, {transform_indices = @transform_2, window_bounds = array<i64: 2, 8, 32>}, {transform_indices = @transform_3, window_bounds = array<i64: 2, 8, 32>}, {pipeline_mode = #tpu.pipeline_mode<synchronous>, transform_indices = @transform_4, window_bounds = array<i64: 4, 32, 8>}, {pipeline_mode = #tpu.pipeline_mode<synchronous>, transform_indices = @transform_5, window_bounds = array<i64: 4, 32, 8>}, {pipeline_mode = #tpu.pipeline_mode<synchronous>, transform_indices = @transform_6, window_bounds = array<i64: 4, 32, 8>}, {pipeline_mode = #tpu.pipeline_mode<synchronous>, transform_indices = @transform_7, window_bounds = array<i64: 4, 1, 8>}, {pipeline_mode = #tpu.pipeline_mode<synchronous>, transform_indices = @transform_8, window_bounds = array<i64: 4, 1, 8>}, {pipeline_mode = #tpu.pipeline_mode<synchronous>, transform_indices = @transform_9, window_bounds = array<i64: 4, 1, 8>}, {pipeline_mode = #tpu.pipeline_mode<synchronous>, transform_indices = @transform_10, window_bounds = array<i64: 4, 8, 32>}, {pipeline_mode = #tpu.pipeline_mode<synchronous>, transform_indices = @transform_11, window_bounds = array<i64: 1, 32>}, {pipeline_mode = #tpu.pipeline_mode<synchronous>, transform_indices = @transform_12, window_bounds = array<i64: 32, 64>}, {pipeline_mode = #tpu.pipeline_mode<synchronous>, transform_indices = @transform_13, window_bounds = array<i64: 1, 64>}, {pipeline_mode = #tpu.pipeline_mode<synchronous>, transform_indices = @transform_14, window_bounds = array<i64: 64, 32>}, {pipeline_mode = #tpu.pipeline_mode<synchronous>, transform_indices = @transform_15, window_bounds = array<i64: 1, 32>}, {pipeline_mode = #tpu.pipeline_mode<synchronous>, transform_indices = @transform_16, window_bounds = array<i64: 1, 32>}, {pipeline_mode = #tpu.pipeline_mode<synchronous>, transform_indices = @transform_17, window_bounds = array<i64: 1, 32>}, {pipeline_mode = #tpu.pipeline_mode<synchronous>, transform_indices = @transform_18, window_bounds = array<i64: 1, 32>}, {pipeline_mode = #tpu.pipeline_mode<synchronous>, transform_indices = @transform_19, window_bounds = array<i64: 1, 32>}, {pipeline_mode = #tpu.pipeline_mode<synchronous>, transform_indices = @transform_20, window_bounds = array<i64: 1, 32>}, {pipeline_mode = #tpu.pipeline_mode<synchronous>, transform_indices = @transform_21, window_bounds = array<i64: 1, 32>}, {transform_indices = @transform_22, window_bounds = array<i64: 2, 8, 32>}, {transform_indices = @transform_23, window_bounds = array<i64: 2, 8, 8>}]} {
    %c0 = arith.constant 0 : index
    %c0_0 = arith.constant 0 : index
    %c0_1 = arith.constant 0 : index
    %0 = vector.load %arg1[%c0, %c0_0, %c0_1] : memref<2x8x32xf32, #tpu.memory_space<vmem>>, vector<2x8x32xf32>
    %1 = vector.shape_cast %0 : vector<2x8x32xf32> to vector<16x32xf32>
    %c0_2 = arith.constant 0 : index
    %c0_3 = arith.constant 0 : index
    %c0_4 = arith.constant 0 : index
    %2 = vector.load %arg3[%c0_2, %c0_3, %c0_4] : memref<2x8x32xf32, #tpu.memory_space<vmem>>, vector<2x8x32xf32>
    %3 = vector.shape_cast %2 : vector<2x8x32xf32> to vector<16x32xf32>
    %c0_5 = arith.constant 0 : index
    %c0_6 = arith.constant 0 : index
    %c0_7 = arith.constant 0 : index
    %4 = vector.load %arg2[%c0_5, %c0_6, %c0_7] : memref<2x8x32xf32, #tpu.memory_space<vmem>>, vector<2x8x32xf32>
    %5 = vector.shape_cast %4 : vector<2x8x32xf32> to vector<16x32xf32>
    %c0_8 = arith.constant 0 : index
    %c0_9 = arith.constant 0 : index
    %c0_10 = arith.constant 0 : index
    %6 = vector.load %arg4[%c0_8, %c0_9, %c0_10] : memref<2x8x32xf32, #tpu.memory_space<vmem>>, vector<2x8x32xf32>
    %7 = vector.shape_cast %6 : vector<2x8x32xf32> to vector<16x32xf32>
    %c0_11 = arith.constant 0 : index
    %c0_12 = arith.constant 0 : index
    %8 = vector.load %arg17[%c0_11, %c0_12] : memref<1x32xf32, #tpu.memory_space<vmem>>, vector<1x32xf32>
    %c0_13 = arith.constant 0 : index
    %c0_14 = arith.constant 0 : index
    %9 = vector.load %arg18[%c0_13, %c0_14] : memref<1x32xf32, #tpu.memory_space<vmem>>, vector<1x32xf32>
    %cst = arith.constant dense<0.000000e+00> : vector<16xf32>
    %10 = vector.multi_reduction <add>, %1, %cst [1] : vector<16x32xf32> to vector<16xf32>
    %11 = vector.shape_cast %10 : vector<16xf32> to vector<16x1xf32>
    %cst_15 = arith.constant 3.200000e+01 : f32
    %12 = vector.broadcast %cst_15 : f32 to vector<16x1xf32>
    %13 = arith.divf %11, %12 : vector<16x1xf32>
    %14 = vector.broadcast %13 : vector<16x1xf32> to vector<16x32xf32>
    %15 = arith.subf %1, %14 : vector<16x32xf32>
    %16 = arith.mulf %15, %15 : vector<16x32xf32>
    %cst_16 = arith.constant dense<0.000000e+00> : vector<16xf32>
    %17 = vector.multi_reduction <add>, %16, %cst_16 [1] : vector<16x32xf32> to vector<16xf32>
    %18 = vector.shape_cast %17 : vector<16xf32> to vector<16x1xf32>
    %cst_17 = arith.constant 3.200000e+01 : f32
    %19 = vector.broadcast %cst_17 : f32 to vector<16x1xf32>
    %20 = arith.divf %18, %19 : vector<16x1xf32>
    %cst_18 = arith.constant 9.99999974E-6 : f32
    %21 = vector.broadcast %cst_18 : f32 to vector<16x1xf32>
    %22 = arith.addf %20, %21 : vector<16x1xf32>
    %23 = math.rsqrt %22 : vector<16x1xf32>
    %24 = vector.broadcast %23 : vector<16x1xf32> to vector<16x32xf32>
    %25 = arith.mulf %15, %24 : vector<16x32xf32>
    %26 = vector.broadcast %8 : vector<1x32xf32> to vector<16x32xf32>
    %27 = arith.mulf %25, %26 : vector<16x32xf32>
    %28 = vector.broadcast %9 : vector<1x32xf32> to vector<16x32xf32>
    %29 = arith.addf %27, %28 : vector<16x32xf32>
    %30 = arith.addf %29, %3 : vector<16x32xf32>
    %31 = arith.addf %5, %7 : vector<16x32xf32>
    %cst_19 = arith.constant 0.000000e+00 : f32
    %32 = vector.broadcast %cst_19 : f32 to vector<16x32xf32>
    %cst_20 = arith.constant 0.000000e+00 : f32
    %33 = vector.broadcast %cst_20 : f32 to vector<2x8x8xf32>
    %c0_21 = arith.constant 0 : index
    %c0_22 = arith.constant 0 : index
    %c0_23 = arith.constant 0 : index
    %34 = vector.load %arg5[%c0_21, %c0_22, %c0_23] : memref<4x32x8xf32, #tpu.memory_space<vmem>>, vector<1x32x8xf32>
    %35 = vector.shape_cast %34 : vector<1x32x8xf32> to vector<32x8xf32>
    %cst_24 = arith.constant dense<0.000000e+00> : vector<16x8xf32>
    %36 = tpu.matmul %30, %35, %cst_24 {dimension_numbers = #tpu.dot_dimension_numbers<[1], [0], [0], [1], [0, 0, 1, 1], [], []>} : vector<16x32xf32>, vector<32x8xf32>, vector<16x8xf32> -> vector<16x8xf32>
    %c0_25 = arith.constant 0 : index
    %c0_26 = arith.constant 0 : index
    %c0_27 = arith.constant 0 : index
    %37 = vector.load %arg8[%c0_25, %c0_26, %c0_27] : memref<4x1x8xf32, #tpu.memory_space<vmem>>, vector<1x1x8xf32>
    %38 = vector.shape_cast %37 : vector<1x1x8xf32> to vector<1x8xf32>
    %39 = vector.broadcast %38 : vector<1x8xf32> to vector<16x8xf32>
    %40 = arith.addf %36, %39 : vector<16x8xf32>
    %cst_28 = arith.constant 0.353553385 : f32
    %41 = vector.broadcast %cst_28 : f32 to vector<16x8xf32>
    %42 = arith.mulf %40, %41 : vector<16x8xf32>
    %c0_29 = arith.constant 0 : index
    %c0_30 = arith.constant 0 : index
    %c0_31 = arith.constant 0 : index
    %43 = vector.load %arg6[%c0_29, %c0_30, %c0_31] : memref<4x32x8xf32, #tpu.memory_space<vmem>>, vector<1x32x8xf32>
    %44 = vector.shape_cast %43 : vector<1x32x8xf32> to vector<32x8xf32>
    %cst_32 = arith.constant dense<0.000000e+00> : vector<16x8xf32>
    %45 = tpu.matmul %31, %44, %cst_32 {dimension_numbers = #tpu.dot_dimension_numbers<[1], [0], [0], [1], [0, 0, 1, 1], [], []>} : vector<16x32xf32>, vector<32x8xf32>, vector<16x8xf32> -> vector<16x8xf32>
    %c0_33 = arith.constant 0 : index
    %c0_34 = arith.constant 0 : index
    %c0_35 = arith.constant 0 : index
    %46 = vector.load %arg9[%c0_33, %c0_34, %c0_35] : memref<4x1x8xf32, #tpu.memory_space<vmem>>, vector<1x1x8xf32>
    %47 = vector.shape_cast %46 : vector<1x1x8xf32> to vector<1x8xf32>
    %48 = vector.broadcast %47 : vector<1x8xf32> to vector<16x8xf32>
    %49 = arith.addf %45, %48 : vector<16x8xf32>
    %c0_36 = arith.constant 0 : index
    %c0_37 = arith.constant 0 : index
    %c0_38 = arith.constant 0 : index
    %50 = vector.load %arg7[%c0_36, %c0_37, %c0_38] : memref<4x32x8xf32, #tpu.memory_space<vmem>>, vector<1x32x8xf32>
    %51 = vector.shape_cast %50 : vector<1x32x8xf32> to vector<32x8xf32>
    %cst_39 = arith.constant dense<0.000000e+00> : vector<16x8xf32>
    %52 = tpu.matmul %5, %51, %cst_39 {dimension_numbers = #tpu.dot_dimension_numbers<[1], [0], [0], [1], [0, 0, 1, 1], [], []>} : vector<16x32xf32>, vector<32x8xf32>, vector<16x8xf32> -> vector<16x8xf32>
    %c0_40 = arith.constant 0 : index
    %c0_41 = arith.constant 0 : index
    %c0_42 = arith.constant 0 : index
    %53 = vector.load %arg10[%c0_40, %c0_41, %c0_42] : memref<4x1x8xf32, #tpu.memory_space<vmem>>, vector<1x1x8xf32>
    %54 = vector.shape_cast %53 : vector<1x1x8xf32> to vector<1x8xf32>
    %55 = vector.broadcast %54 : vector<1x8xf32> to vector<16x8xf32>
    %56 = arith.addf %52, %55 : vector<16x8xf32>
    %57 = vector.shape_cast %42 : vector<16x8xf32> to vector<2x8x8xf32>
    %58 = vector.shape_cast %49 : vector<16x8xf32> to vector<2x8x8xf32>
    %59 = vector.shape_cast %56 : vector<16x8xf32> to vector<2x8x8xf32>
    "tpu.trace_start"() <{level = 10 : i32, message = "btd,bsd->bts"}> : () -> ()
    %cst_43 = arith.constant dense<0.000000e+00> : vector<2x8x8xf32>
    %60 = tpu.matmul %57, %58, %cst_43 {dimension_numbers = #tpu.dot_dimension_numbers<[2], [2], [1], [1], [0, 0, 0, 1, 1, 1], [0], [0]>} : vector<2x8x8xf32>, vector<2x8x8xf32>, vector<2x8x8xf32> -> vector<2x8x8xf32>
    "tpu.trace_stop"() : () -> ()
    %cst_44 = arith.constant dense<0xFF800000> : vector<2x8xf32>
    %61 = vector.multi_reduction <maximumf>, %60, %cst_44 [2] : vector<2x8x8xf32> to vector<2x8xf32>
    %62 = vector.shape_cast %61 : vector<2x8xf32> to vector<2x8x1xf32>
    %63 = vector.broadcast %62 : vector<2x8x1xf32> to vector<2x8x8xf32>
    %64 = arith.subf %60, %63 : vector<2x8x8xf32>
    %65 = math.exp %64 : vector<2x8x8xf32>
    %cst_45 = arith.constant dense<0.000000e+00> : vector<2x8xf32>
    %66 = vector.multi_reduction <add>, %65, %cst_45 [2] : vector<2x8x8xf32> to vector<2x8xf32>
    %67 = vector.shape_cast %66 : vector<2x8xf32> to vector<2x8x1xf32>
    %68 = tpu.reciprocal %67 : vector<2x8x1xf32> -> vector<2x8x1xf32>
    %69 = vector.broadcast %68 : vector<2x8x1xf32> to vector<2x8x8xf32>
    %70 = arith.mulf %65, %69 : vector<2x8x8xf32>
    %71 = arith.addf %33, %70 : vector<2x8x8xf32>
    "tpu.trace_start"() <{level = 10 : i32, message = "bts,bsd->btd"}> : () -> ()
    %cst_46 = arith.constant dense<0.000000e+00> : vector<2x8x8xf32>
    %72 = tpu.matmul %70, %59, %cst_46 {dimension_numbers = #tpu.dot_dimension_numbers<[2], [1], [1], [2], [0, 0, 0, 1, 1, 2], [0], [0]>} : vector<2x8x8xf32>, vector<2x8x8xf32>, vector<2x8x8xf32> -> vector<2x8x8xf32>
    "tpu.trace_stop"() : () -> ()
    %73 = vector.shape_cast %72 : vector<2x8x8xf32> to vector<16x8xf32>
    %c0_47 = arith.constant 0 : index
    %c0_48 = arith.constant 0 : index
    %c0_49 = arith.constant 0 : index
    %74 = vector.load %arg11[%c0_47, %c0_48, %c0_49] : memref<4x8x32xf32, #tpu.memory_space<vmem>>, vector<1x8x32xf32>
    %75 = vector.shape_cast %74 : vector<1x8x32xf32> to vector<8x32xf32>
    %cst_50 = arith.constant dense<0.000000e+00> : vector<16x32xf32>
    %76 = tpu.matmul %73, %75, %cst_50 {dimension_numbers = #tpu.dot_dimension_numbers<[1], [0], [0], [1], [0, 0, 1, 1], [], []>} : vector<16x8xf32>, vector<8x32xf32>, vector<16x32xf32> -> vector<16x32xf32>
    %77 = arith.addf %32, %76 : vector<16x32xf32>
    %c1 = arith.constant 1 : index
    %c0_51 = arith.constant 0 : index
    %c0_52 = arith.constant 0 : index
    %78 = vector.load %arg5[%c1, %c0_51, %c0_52] : memref<4x32x8xf32, #tpu.memory_space<vmem>>, vector<1x32x8xf32>
    %79 = vector.shape_cast %78 : vector<1x32x8xf32> to vector<32x8xf32>
    %cst_53 = arith.constant dense<0.000000e+00> : vector<16x8xf32>
    %80 = tpu.matmul %30, %79, %cst_53 {dimension_numbers = #tpu.dot_dimension_numbers<[1], [0], [0], [1], [0, 0, 1, 1], [], []>} : vector<16x32xf32>, vector<32x8xf32>, vector<16x8xf32> -> vector<16x8xf32>
    %c1_54 = arith.constant 1 : index
    %c0_55 = arith.constant 0 : index
    %c0_56 = arith.constant 0 : index
    %81 = vector.load %arg8[%c1_54, %c0_55, %c0_56] : memref<4x1x8xf32, #tpu.memory_space<vmem>>, vector<1x1x8xf32>
    %82 = vector.shape_cast %81 : vector<1x1x8xf32> to vector<1x8xf32>
    %83 = vector.broadcast %82 : vector<1x8xf32> to vector<16x8xf32>
    %84 = arith.addf %80, %83 : vector<16x8xf32>
    %cst_57 = arith.constant 0.353553385 : f32
    %85 = vector.broadcast %cst_57 : f32 to vector<16x8xf32>
    %86 = arith.mulf %84, %85 : vector<16x8xf32>
    %c1_58 = arith.constant 1 : index
    %c0_59 = arith.constant 0 : index
    %c0_60 = arith.constant 0 : index
    %87 = vector.load %arg6[%c1_58, %c0_59, %c0_60] : memref<4x32x8xf32, #tpu.memory_space<vmem>>, vector<1x32x8xf32>
    %88 = vector.shape_cast %87 : vector<1x32x8xf32> to vector<32x8xf32>
    %cst_61 = arith.constant dense<0.000000e+00> : vector<16x8xf32>
    %89 = tpu.matmul %31, %88, %cst_61 {dimension_numbers = #tpu.dot_dimension_numbers<[1], [0], [0], [1], [0, 0, 1, 1], [], []>} : vector<16x32xf32>, vector<32x8xf32>, vector<16x8xf32> -> vector<16x8xf32>
    %c1_62 = arith.constant 1 : index
    %c0_63 = arith.constant 0 : index
    %c0_64 = arith.constant 0 : index
    %90 = vector.load %arg9[%c1_62, %c0_63, %c0_64] : memref<4x1x8xf32, #tpu.memory_space<vmem>>, vector<1x1x8xf32>
    %91 = vector.shape_cast %90 : vector<1x1x8xf32> to vector<1x8xf32>
    %92 = vector.broadcast %91 : vector<1x8xf32> to vector<16x8xf32>
    %93 = arith.addf %89, %92 : vector<16x8xf32>
    %c1_65 = arith.constant 1 : index
    %c0_66 = arith.constant 0 : index
    %c0_67 = arith.constant 0 : index
    %94 = vector.load %arg7[%c1_65, %c0_66, %c0_67] : memref<4x32x8xf32, #tpu.memory_space<vmem>>, vector<1x32x8xf32>
    %95 = vector.shape_cast %94 : vector<1x32x8xf32> to vector<32x8xf32>
    %cst_68 = arith.constant dense<0.000000e+00> : vector<16x8xf32>
    %96 = tpu.matmul %5, %95, %cst_68 {dimension_numbers = #tpu.dot_dimension_numbers<[1], [0], [0], [1], [0, 0, 1, 1], [], []>} : vector<16x32xf32>, vector<32x8xf32>, vector<16x8xf32> -> vector<16x8xf32>
    %c1_69 = arith.constant 1 : index
    %c0_70 = arith.constant 0 : index
    %c0_71 = arith.constant 0 : index
    %97 = vector.load %arg10[%c1_69, %c0_70, %c0_71] : memref<4x1x8xf32, #tpu.memory_space<vmem>>, vector<1x1x8xf32>
    %98 = vector.shape_cast %97 : vector<1x1x8xf32> to vector<1x8xf32>
    %99 = vector.broadcast %98 : vector<1x8xf32> to vector<16x8xf32>
    %100 = arith.addf %96, %99 : vector<16x8xf32>
    %101 = vector.shape_cast %86 : vector<16x8xf32> to vector<2x8x8xf32>
    %102 = vector.shape_cast %93 : vector<16x8xf32> to vector<2x8x8xf32>
    %103 = vector.shape_cast %100 : vector<16x8xf32> to vector<2x8x8xf32>
    "tpu.trace_start"() <{level = 10 : i32, message = "btd,bsd->bts"}> : () -> ()
    %cst_72 = arith.constant dense<0.000000e+00> : vector<2x8x8xf32>
    %104 = tpu.matmul %101, %102, %cst_72 {dimension_numbers = #tpu.dot_dimension_numbers<[2], [2], [1], [1], [0, 0, 0, 1, 1, 1], [0], [0]>} : vector<2x8x8xf32>, vector<2x8x8xf32>, vector<2x8x8xf32> -> vector<2x8x8xf32>
    "tpu.trace_stop"() : () -> ()
    %cst_73 = arith.constant dense<0xFF800000> : vector<2x8xf32>
    %105 = vector.multi_reduction <maximumf>, %104, %cst_73 [2] : vector<2x8x8xf32> to vector<2x8xf32>
    %106 = vector.shape_cast %105 : vector<2x8xf32> to vector<2x8x1xf32>
    %107 = vector.broadcast %106 : vector<2x8x1xf32> to vector<2x8x8xf32>
    %108 = arith.subf %104, %107 : vector<2x8x8xf32>
    %109 = math.exp %108 : vector<2x8x8xf32>
    %cst_74 = arith.constant dense<0.000000e+00> : vector<2x8xf32>
    %110 = vector.multi_reduction <add>, %109, %cst_74 [2] : vector<2x8x8xf32> to vector<2x8xf32>
    %111 = vector.shape_cast %110 : vector<2x8xf32> to vector<2x8x1xf32>
    %112 = tpu.reciprocal %111 : vector<2x8x1xf32> -> vector<2x8x1xf32>
    %113 = vector.broadcast %112 : vector<2x8x1xf32> to vector<2x8x8xf32>
    %114 = arith.mulf %109, %113 : vector<2x8x8xf32>
    %115 = arith.addf %71, %114 : vector<2x8x8xf32>
    "tpu.trace_start"() <{level = 10 : i32, message = "bts,bsd->btd"}> : () -> ()
    %cst_75 = arith.constant dense<0.000000e+00> : vector<2x8x8xf32>
    %116 = tpu.matmul %114, %103, %cst_75 {dimension_numbers = #tpu.dot_dimension_numbers<[2], [1], [1], [2], [0, 0, 0, 1, 1, 2], [0], [0]>} : vector<2x8x8xf32>, vector<2x8x8xf32>, vector<2x8x8xf32> -> vector<2x8x8xf32>
    "tpu.trace_stop"() : () -> ()
    %117 = vector.shape_cast %116 : vector<2x8x8xf32> to vector<16x8xf32>
    %c1_76 = arith.constant 1 : index
    %c0_77 = arith.constant 0 : index
    %c0_78 = arith.constant 0 : index
    %118 = vector.load %arg11[%c1_76, %c0_77, %c0_78] : memref<4x8x32xf32, #tpu.memory_space<vmem>>, vector<1x8x32xf32>
    %119 = vector.shape_cast %118 : vector<1x8x32xf32> to vector<8x32xf32>
    %cst_79 = arith.constant dense<0.000000e+00> : vector<16x32xf32>
    %120 = tpu.matmul %117, %119, %cst_79 {dimension_numbers = #tpu.dot_dimension_numbers<[1], [0], [0], [1], [0, 0, 1, 1], [], []>} : vector<16x8xf32>, vector<8x32xf32>, vector<16x32xf32> -> vector<16x32xf32>
    %121 = arith.addf %77, %120 : vector<16x32xf32>
    %c2 = arith.constant 2 : index
    %c0_80 = arith.constant 0 : index
    %c0_81 = arith.constant 0 : index
    %122 = vector.load %arg5[%c2, %c0_80, %c0_81] : memref<4x32x8xf32, #tpu.memory_space<vmem>>, vector<1x32x8xf32>
    %123 = vector.shape_cast %122 : vector<1x32x8xf32> to vector<32x8xf32>
    %cst_82 = arith.constant dense<0.000000e+00> : vector<16x8xf32>
    %124 = tpu.matmul %30, %123, %cst_82 {dimension_numbers = #tpu.dot_dimension_numbers<[1], [0], [0], [1], [0, 0, 1, 1], [], []>} : vector<16x32xf32>, vector<32x8xf32>, vector<16x8xf32> -> vector<16x8xf32>
    %c2_83 = arith.constant 2 : index
    %c0_84 = arith.constant 0 : index
    %c0_85 = arith.constant 0 : index
    %125 = vector.load %arg8[%c2_83, %c0_84, %c0_85] : memref<4x1x8xf32, #tpu.memory_space<vmem>>, vector<1x1x8xf32>
    %126 = vector.shape_cast %125 : vector<1x1x8xf32> to vector<1x8xf32>
    %127 = vector.broadcast %126 : vector<1x8xf32> to vector<16x8xf32>
    %128 = arith.addf %124, %127 : vector<16x8xf32>
    %cst_86 = arith.constant 0.353553385 : f32
    %129 = vector.broadcast %cst_86 : f32 to vector<16x8xf32>
    %130 = arith.mulf %128, %129 : vector<16x8xf32>
    %c2_87 = arith.constant 2 : index
    %c0_88 = arith.constant 0 : index
    %c0_89 = arith.constant 0 : index
    %131 = vector.load %arg6[%c2_87, %c0_88, %c0_89] : memref<4x32x8xf32, #tpu.memory_space<vmem>>, vector<1x32x8xf32>
    %132 = vector.shape_cast %131 : vector<1x32x8xf32> to vector<32x8xf32>
    %cst_90 = arith.constant dense<0.000000e+00> : vector<16x8xf32>
    %133 = tpu.matmul %31, %132, %cst_90 {dimension_numbers = #tpu.dot_dimension_numbers<[1], [0], [0], [1], [0, 0, 1, 1], [], []>} : vector<16x32xf32>, vector<32x8xf32>, vector<16x8xf32> -> vector<16x8xf32>
    %c2_91 = arith.constant 2 : index
    %c0_92 = arith.constant 0 : index
    %c0_93 = arith.constant 0 : index
    %134 = vector.load %arg9[%c2_91, %c0_92, %c0_93] : memref<4x1x8xf32, #tpu.memory_space<vmem>>, vector<1x1x8xf32>
    %135 = vector.shape_cast %134 : vector<1x1x8xf32> to vector<1x8xf32>
    %136 = vector.broadcast %135 : vector<1x8xf32> to vector<16x8xf32>
    %137 = arith.addf %133, %136 : vector<16x8xf32>
    %c2_94 = arith.constant 2 : index
    %c0_95 = arith.constant 0 : index
    %c0_96 = arith.constant 0 : index
    %138 = vector.load %arg7[%c2_94, %c0_95, %c0_96] : memref<4x32x8xf32, #tpu.memory_space<vmem>>, vector<1x32x8xf32>
    %139 = vector.shape_cast %138 : vector<1x32x8xf32> to vector<32x8xf32>
    %cst_97 = arith.constant dense<0.000000e+00> : vector<16x8xf32>
    %140 = tpu.matmul %5, %139, %cst_97 {dimension_numbers = #tpu.dot_dimension_numbers<[1], [0], [0], [1], [0, 0, 1, 1], [], []>} : vector<16x32xf32>, vector<32x8xf32>, vector<16x8xf32> -> vector<16x8xf32>
    %c2_98 = arith.constant 2 : index
    %c0_99 = arith.constant 0 : index
    %c0_100 = arith.constant 0 : index
    %141 = vector.load %arg10[%c2_98, %c0_99, %c0_100] : memref<4x1x8xf32, #tpu.memory_space<vmem>>, vector<1x1x8xf32>
    %142 = vector.shape_cast %141 : vector<1x1x8xf32> to vector<1x8xf32>
    %143 = vector.broadcast %142 : vector<1x8xf32> to vector<16x8xf32>
    %144 = arith.addf %140, %143 : vector<16x8xf32>
    %145 = vector.shape_cast %130 : vector<16x8xf32> to vector<2x8x8xf32>
    %146 = vector.shape_cast %137 : vector<16x8xf32> to vector<2x8x8xf32>
    %147 = vector.shape_cast %144 : vector<16x8xf32> to vector<2x8x8xf32>
    "tpu.trace_start"() <{level = 10 : i32, message = "btd,bsd->bts"}> : () -> ()
    %cst_101 = arith.constant dense<0.000000e+00> : vector<2x8x8xf32>
    %148 = tpu.matmul %145, %146, %cst_101 {dimension_numbers = #tpu.dot_dimension_numbers<[2], [2], [1], [1], [0, 0, 0, 1, 1, 1], [0], [0]>} : vector<2x8x8xf32>, vector<2x8x8xf32>, vector<2x8x8xf32> -> vector<2x8x8xf32>
    "tpu.trace_stop"() : () -> ()
    %cst_102 = arith.constant dense<0xFF800000> : vector<2x8xf32>
    %149 = vector.multi_reduction <maximumf>, %148, %cst_102 [2] : vector<2x8x8xf32> to vector<2x8xf32>
    %150 = vector.shape_cast %149 : vector<2x8xf32> to vector<2x8x1xf32>
    %151 = vector.broadcast %150 : vector<2x8x1xf32> to vector<2x8x8xf32>
    %152 = arith.subf %148, %151 : vector<2x8x8xf32>
    %153 = math.exp %152 : vector<2x8x8xf32>
    %cst_103 = arith.constant dense<0.000000e+00> : vector<2x8xf32>
    %154 = vector.multi_reduction <add>, %153, %cst_103 [2] : vector<2x8x8xf32> to vector<2x8xf32>
    %155 = vector.shape_cast %154 : vector<2x8xf32> to vector<2x8x1xf32>
    %156 = tpu.reciprocal %155 : vector<2x8x1xf32> -> vector<2x8x1xf32>
    %157 = vector.broadcast %156 : vector<2x8x1xf32> to vector<2x8x8xf32>
    %158 = arith.mulf %153, %157 : vector<2x8x8xf32>
    %159 = arith.addf %115, %158 : vector<2x8x8xf32>
    "tpu.trace_start"() <{level = 10 : i32, message = "bts,bsd->btd"}> : () -> ()
    %cst_104 = arith.constant dense<0.000000e+00> : vector<2x8x8xf32>
    %160 = tpu.matmul %158, %147, %cst_104 {dimension_numbers = #tpu.dot_dimension_numbers<[2], [1], [1], [2], [0, 0, 0, 1, 1, 2], [0], [0]>} : vector<2x8x8xf32>, vector<2x8x8xf32>, vector<2x8x8xf32> -> vector<2x8x8xf32>
    "tpu.trace_stop"() : () -> ()
    %161 = vector.shape_cast %160 : vector<2x8x8xf32> to vector<16x8xf32>
    %c2_105 = arith.constant 2 : index
    %c0_106 = arith.constant 0 : index
    %c0_107 = arith.constant 0 : index
    %162 = vector.load %arg11[%c2_105, %c0_106, %c0_107] : memref<4x8x32xf32, #tpu.memory_space<vmem>>, vector<1x8x32xf32>
    %163 = vector.shape_cast %162 : vector<1x8x32xf32> to vector<8x32xf32>
    %cst_108 = arith.constant dense<0.000000e+00> : vector<16x32xf32>
    %164 = tpu.matmul %161, %163, %cst_108 {dimension_numbers = #tpu.dot_dimension_numbers<[1], [0], [0], [1], [0, 0, 1, 1], [], []>} : vector<16x8xf32>, vector<8x32xf32>, vector<16x32xf32> -> vector<16x32xf32>
    %165 = arith.addf %121, %164 : vector<16x32xf32>
    %c3 = arith.constant 3 : index
    %c0_109 = arith.constant 0 : index
    %c0_110 = arith.constant 0 : index
    %166 = vector.load %arg5[%c3, %c0_109, %c0_110] : memref<4x32x8xf32, #tpu.memory_space<vmem>>, vector<1x32x8xf32>
    %167 = vector.shape_cast %166 : vector<1x32x8xf32> to vector<32x8xf32>
    %cst_111 = arith.constant dense<0.000000e+00> : vector<16x8xf32>
    %168 = tpu.matmul %30, %167, %cst_111 {dimension_numbers = #tpu.dot_dimension_numbers<[1], [0], [0], [1], [0, 0, 1, 1], [], []>} : vector<16x32xf32>, vector<32x8xf32>, vector<16x8xf32> -> vector<16x8xf32>
    %c3_112 = arith.constant 3 : index
    %c0_113 = arith.constant 0 : index
    %c0_114 = arith.constant 0 : index
    %169 = vector.load %arg8[%c3_112, %c0_113, %c0_114] : memref<4x1x8xf32, #tpu.memory_space<vmem>>, vector<1x1x8xf32>
    %170 = vector.shape_cast %169 : vector<1x1x8xf32> to vector<1x8xf32>
    %171 = vector.broadcast %170 : vector<1x8xf32> to vector<16x8xf32>
    %172 = arith.addf %168, %171 : vector<16x8xf32>
    %cst_115 = arith.constant 0.353553385 : f32
    %173 = vector.broadcast %cst_115 : f32 to vector<16x8xf32>
    %174 = arith.mulf %172, %173 : vector<16x8xf32>
    %c3_116 = arith.constant 3 : index
    %c0_117 = arith.constant 0 : index
    %c0_118 = arith.constant 0 : index
    %175 = vector.load %arg6[%c3_116, %c0_117, %c0_118] : memref<4x32x8xf32, #tpu.memory_space<vmem>>, vector<1x32x8xf32>
    %176 = vector.shape_cast %175 : vector<1x32x8xf32> to vector<32x8xf32>
    %cst_119 = arith.constant dense<0.000000e+00> : vector<16x8xf32>
    %177 = tpu.matmul %31, %176, %cst_119 {dimension_numbers = #tpu.dot_dimension_numbers<[1], [0], [0], [1], [0, 0, 1, 1], [], []>} : vector<16x32xf32>, vector<32x8xf32>, vector<16x8xf32> -> vector<16x8xf32>
    %c3_120 = arith.constant 3 : index
    %c0_121 = arith.constant 0 : index
    %c0_122 = arith.constant 0 : index
    %178 = vector.load %arg9[%c3_120, %c0_121, %c0_122] : memref<4x1x8xf32, #tpu.memory_space<vmem>>, vector<1x1x8xf32>
    %179 = vector.shape_cast %178 : vector<1x1x8xf32> to vector<1x8xf32>
    %180 = vector.broadcast %179 : vector<1x8xf32> to vector<16x8xf32>
    %181 = arith.addf %177, %180 : vector<16x8xf32>
    %c3_123 = arith.constant 3 : index
    %c0_124 = arith.constant 0 : index
    %c0_125 = arith.constant 0 : index
    %182 = vector.load %arg7[%c3_123, %c0_124, %c0_125] : memref<4x32x8xf32, #tpu.memory_space<vmem>>, vector<1x32x8xf32>
    %183 = vector.shape_cast %182 : vector<1x32x8xf32> to vector<32x8xf32>
    %cst_126 = arith.constant dense<0.000000e+00> : vector<16x8xf32>
    %184 = tpu.matmul %5, %183, %cst_126 {dimension_numbers = #tpu.dot_dimension_numbers<[1], [0], [0], [1], [0, 0, 1, 1], [], []>} : vector<16x32xf32>, vector<32x8xf32>, vector<16x8xf32> -> vector<16x8xf32>
    %c3_127 = arith.constant 3 : index
    %c0_128 = arith.constant 0 : index
    %c0_129 = arith.constant 0 : index
    %185 = vector.load %arg10[%c3_127, %c0_128, %c0_129] : memref<4x1x8xf32, #tpu.memory_space<vmem>>, vector<1x1x8xf32>
    %186 = vector.shape_cast %185 : vector<1x1x8xf32> to vector<1x8xf32>
    %187 = vector.broadcast %186 : vector<1x8xf32> to vector<16x8xf32>
    %188 = arith.addf %184, %187 : vector<16x8xf32>
    %189 = vector.shape_cast %174 : vector<16x8xf32> to vector<2x8x8xf32>
    %190 = vector.shape_cast %181 : vector<16x8xf32> to vector<2x8x8xf32>
    %191 = vector.shape_cast %188 : vector<16x8xf32> to vector<2x8x8xf32>
    "tpu.trace_start"() <{level = 10 : i32, message = "btd,bsd->bts"}> : () -> ()
    %cst_130 = arith.constant dense<0.000000e+00> : vector<2x8x8xf32>
    %192 = tpu.matmul %189, %190, %cst_130 {dimension_numbers = #tpu.dot_dimension_numbers<[2], [2], [1], [1], [0, 0, 0, 1, 1, 1], [0], [0]>} : vector<2x8x8xf32>, vector<2x8x8xf32>, vector<2x8x8xf32> -> vector<2x8x8xf32>
    "tpu.trace_stop"() : () -> ()
    %cst_131 = arith.constant dense<0xFF800000> : vector<2x8xf32>
    %193 = vector.multi_reduction <maximumf>, %192, %cst_131 [2] : vector<2x8x8xf32> to vector<2x8xf32>
    %194 = vector.shape_cast %193 : vector<2x8xf32> to vector<2x8x1xf32>
    %195 = vector.broadcast %194 : vector<2x8x1xf32> to vector<2x8x8xf32>
    %196 = arith.subf %192, %195 : vector<2x8x8xf32>
    %197 = math.exp %196 : vector<2x8x8xf32>
    %cst_132 = arith.constant dense<0.000000e+00> : vector<2x8xf32>
    %198 = vector.multi_reduction <add>, %197, %cst_132 [2] : vector<2x8x8xf32> to vector<2x8xf32>
    %199 = vector.shape_cast %198 : vector<2x8xf32> to vector<2x8x1xf32>
    %200 = tpu.reciprocal %199 : vector<2x8x1xf32> -> vector<2x8x1xf32>
    %201 = vector.broadcast %200 : vector<2x8x1xf32> to vector<2x8x8xf32>
    %202 = arith.mulf %197, %201 : vector<2x8x8xf32>
    %203 = arith.addf %159, %202 : vector<2x8x8xf32>
    "tpu.trace_start"() <{level = 10 : i32, message = "bts,bsd->btd"}> : () -> ()
    %cst_133 = arith.constant dense<0.000000e+00> : vector<2x8x8xf32>
    %204 = tpu.matmul %202, %191, %cst_133 {dimension_numbers = #tpu.dot_dimension_numbers<[2], [1], [1], [2], [0, 0, 0, 1, 1, 2], [0], [0]>} : vector<2x8x8xf32>, vector<2x8x8xf32>, vector<2x8x8xf32> -> vector<2x8x8xf32>
    "tpu.trace_stop"() : () -> ()
    %205 = vector.shape_cast %204 : vector<2x8x8xf32> to vector<16x8xf32>
    %c3_134 = arith.constant 3 : index
    %c0_135 = arith.constant 0 : index
    %c0_136 = arith.constant 0 : index
    %206 = vector.load %arg11[%c3_134, %c0_135, %c0_136] : memref<4x8x32xf32, #tpu.memory_space<vmem>>, vector<1x8x32xf32>
    %207 = vector.shape_cast %206 : vector<1x8x32xf32> to vector<8x32xf32>
    %cst_137 = arith.constant dense<0.000000e+00> : vector<16x32xf32>
    %208 = tpu.matmul %205, %207, %cst_137 {dimension_numbers = #tpu.dot_dimension_numbers<[1], [0], [0], [1], [0, 0, 1, 1], [], []>} : vector<16x8xf32>, vector<8x32xf32>, vector<16x32xf32> -> vector<16x32xf32>
    %209 = arith.addf %165, %208 : vector<16x32xf32>
    %c0_138 = arith.constant 0 : index
    %c0_139 = arith.constant 0 : index
    %210 = vector.load %arg12[%c0_138, %c0_139] : memref<1x32xf32, #tpu.memory_space<vmem>>, vector<1x32xf32>
    %211 = vector.broadcast %210 : vector<1x32xf32> to vector<16x32xf32>
    %212 = arith.addf %209, %211 : vector<16x32xf32>
    %213 = arith.addf %29, %212 : vector<16x32xf32>
    %c0_140 = arith.constant 0 : index
    %c0_141 = arith.constant 0 : index
    %214 = vector.load %arg19[%c0_140, %c0_141] : memref<1x32xf32, #tpu.memory_space<vmem>>, vector<1x32xf32>
    %c0_142 = arith.constant 0 : index
    %c0_143 = arith.constant 0 : index
    %215 = vector.load %arg20[%c0_142, %c0_143] : memref<1x32xf32, #tpu.memory_space<vmem>>, vector<1x32xf32>
    %cst_144 = arith.constant dense<0.000000e+00> : vector<16xf32>
    %216 = vector.multi_reduction <add>, %213, %cst_144 [1] : vector<16x32xf32> to vector<16xf32>
    %217 = vector.shape_cast %216 : vector<16xf32> to vector<16x1xf32>
    %cst_145 = arith.constant 3.200000e+01 : f32
    %218 = vector.broadcast %cst_145 : f32 to vector<16x1xf32>
    %219 = arith.divf %217, %218 : vector<16x1xf32>
    %220 = vector.broadcast %219 : vector<16x1xf32> to vector<16x32xf32>
    %221 = arith.subf %213, %220 : vector<16x32xf32>
    %222 = arith.mulf %221, %221 : vector<16x32xf32>
    %cst_146 = arith.constant dense<0.000000e+00> : vector<16xf32>
    %223 = vector.multi_reduction <add>, %222, %cst_146 [1] : vector<16x32xf32> to vector<16xf32>
    %224 = vector.shape_cast %223 : vector<16xf32> to vector<16x1xf32>
    %cst_147 = arith.constant 3.200000e+01 : f32
    %225 = vector.broadcast %cst_147 : f32 to vector<16x1xf32>
    %226 = arith.divf %224, %225 : vector<16x1xf32>
    %cst_148 = arith.constant 9.99999974E-6 : f32
    %227 = vector.broadcast %cst_148 : f32 to vector<16x1xf32>
    %228 = arith.addf %226, %227 : vector<16x1xf32>
    %229 = math.rsqrt %228 : vector<16x1xf32>
    %230 = vector.broadcast %229 : vector<16x1xf32> to vector<16x32xf32>
    %231 = arith.mulf %221, %230 : vector<16x32xf32>
    %232 = vector.broadcast %214 : vector<1x32xf32> to vector<16x32xf32>
    %233 = arith.mulf %231, %232 : vector<16x32xf32>
    %234 = vector.broadcast %215 : vector<1x32xf32> to vector<16x32xf32>
    %235 = arith.addf %233, %234 : vector<16x32xf32>
    %c0_149 = arith.constant 0 : index
    %c0_150 = arith.constant 0 : index
    %236 = vector.load %arg13[%c0_149, %c0_150] : memref<32x64xf32, #tpu.memory_space<vmem>>, vector<32x64xf32>
    %cst_151 = arith.constant dense<0.000000e+00> : vector<16x64xf32>
    %237 = tpu.matmul %235, %236, %cst_151 {dimension_numbers = #tpu.dot_dimension_numbers<[1], [0], [0], [1], [0, 0, 1, 1], [], []>} : vector<16x32xf32>, vector<32x64xf32>, vector<16x64xf32> -> vector<16x64xf32>
    %c0_152 = arith.constant 0 : index
    %c0_153 = arith.constant 0 : index
    %238 = vector.load %arg14[%c0_152, %c0_153] : memref<1x64xf32, #tpu.memory_space<vmem>>, vector<1x64xf32>
    %239 = vector.broadcast %238 : vector<1x64xf32> to vector<16x64xf32>
    %240 = arith.addf %237, %239 : vector<16x64xf32>
    %cst_154 = arith.constant 0.000000e+00 : f32
    %241 = vector.broadcast %cst_154 : f32 to vector<16x64xf32>
    %242 = arith.maximumf %240, %241 : vector<16x64xf32>
    %c0_155 = arith.constant 0 : index
    %c0_156 = arith.constant 0 : index
    %243 = vector.load %arg15[%c0_155, %c0_156] : memref<64x32xf32, #tpu.memory_space<vmem>>, vector<64x32xf32>
    %cst_157 = arith.constant dense<0.000000e+00> : vector<16x32xf32>
    %244 = tpu.matmul %242, %243, %cst_157 {dimension_numbers = #tpu.dot_dimension_numbers<[1], [0], [0], [1], [0, 0, 1, 1], [], []>} : vector<16x64xf32>, vector<64x32xf32>, vector<16x32xf32> -> vector<16x32xf32>
    %c0_158 = arith.constant 0 : index
    %c0_159 = arith.constant 0 : index
    %245 = vector.load %arg16[%c0_158, %c0_159] : memref<1x32xf32, #tpu.memory_space<vmem>>, vector<1x32xf32>
    %246 = vector.broadcast %245 : vector<1x32xf32> to vector<16x32xf32>
    %247 = arith.addf %244, %246 : vector<16x32xf32>
    %248 = arith.addf %235, %247 : vector<16x32xf32>
    %c0_160 = arith.constant 0 : index
    %c0_161 = arith.constant 0 : index
    %249 = vector.load %arg21[%c0_160, %c0_161] : memref<1x32xf32, #tpu.memory_space<vmem>>, vector<1x32xf32>
    %c0_162 = arith.constant 0 : index
    %c0_163 = arith.constant 0 : index
    %250 = vector.load %arg22[%c0_162, %c0_163] : memref<1x32xf32, #tpu.memory_space<vmem>>, vector<1x32xf32>
    %cst_164 = arith.constant dense<0.000000e+00> : vector<16xf32>
    %251 = vector.multi_reduction <add>, %248, %cst_164 [1] : vector<16x32xf32> to vector<16xf32>
    %252 = vector.shape_cast %251 : vector<16xf32> to vector<16x1xf32>
    %cst_165 = arith.constant 3.200000e+01 : f32
    %253 = vector.broadcast %cst_165 : f32 to vector<16x1xf32>
    %254 = arith.divf %252, %253 : vector<16x1xf32>
    %255 = vector.broadcast %254 : vector<16x1xf32> to vector<16x32xf32>
    %256 = arith.subf %248, %255 : vector<16x32xf32>
    %257 = arith.mulf %256, %256 : vector<16x32xf32>
    %cst_166 = arith.constant dense<0.000000e+00> : vector<16xf32>
    %258 = vector.multi_reduction <add>, %257, %cst_166 [1] : vector<16x32xf32> to vector<16xf32>
    %259 = vector.shape_cast %258 : vector<16xf32> to vector<16x1xf32>
    %cst_167 = arith.constant 3.200000e+01 : f32
    %260 = vector.broadcast %cst_167 : f32 to vector<16x1xf32>
    %261 = arith.divf %259, %260 : vector<16x1xf32>
    %cst_168 = arith.constant 9.99999974E-6 : f32
    %262 = vector.broadcast %cst_168 : f32 to vector<16x1xf32>
    %263 = arith.addf %261, %262 : vector<16x1xf32>
    %264 = math.rsqrt %263 : vector<16x1xf32>
    %265 = vector.broadcast %264 : vector<16x1xf32> to vector<16x32xf32>
    %266 = arith.mulf %256, %265 : vector<16x32xf32>
    %267 = vector.broadcast %249 : vector<1x32xf32> to vector<16x32xf32>
    %268 = arith.mulf %266, %267 : vector<16x32xf32>
    %269 = vector.broadcast %250 : vector<1x32xf32> to vector<16x32xf32>
    %270 = arith.addf %268, %269 : vector<16x32xf32>
    %271 = vector.shape_cast %270 : vector<16x32xf32> to vector<2x8x32xf32>
    %c0_169 = arith.constant 0 : index
    %c0_170 = arith.constant 0 : index
    %c0_171 = arith.constant 0 : index
    %272 = vector.load %arg23[%c0_169, %c0_170, %c0_171] : memref<2x8x32xf32, #tpu.memory_space<vmem>>, vector<2x8x32xf32>
    tpu.vector_store %arg23[%c0_169, %c0_170, %c0_171], %271 {strides = array<i32>} : memref<2x8x32xf32, #tpu.memory_space<vmem>>, vector<2x8x32xf32>,
    %cst_172 = arith.constant 2.500000e-01 : f32
    %273 = vector.broadcast %cst_172 : f32 to vector<2x8x8xf32>
    %274 = arith.mulf %203, %273 : vector<2x8x8xf32>
    %c0_173 = arith.constant 0 : index
    %c0_174 = arith.constant 0 : index
    %c0_175 = arith.constant 0 : index
    %275 = vector.load %arg24[%c0_173, %c0_174, %c0_175] : memref<2x8x8xf32, #tpu.memory_space<vmem>>, vector<2x8x8xf32>
    tpu.vector_store %arg24[%c0_173, %c0_174, %c0_175], %274 {strides = array<i32>} : memref<2x8x8xf32, #tpu.memory_space<vmem>>, vector<2x8x8xf32>,
    return
  }
  func.func @transform_0(%arg0: i32) -> (i32, i32, i32) {
    %c0_i32 = arith.constant 0 : i32
    %c0_i32_0 = arith.constant 0 : i32
    %c0_i32_1 = arith.constant 0 : i32
    return %arg0, %c0_i32, %c0_i32_0 : i32, i32, i32
  }
  func.func @transform_1(%arg0: i32) -> (i32, i32, i32) {
    %c0_i32 = arith.constant 0 : i32
    %c0_i32_0 = arith.constant 0 : i32
    %c0_i32_1 = arith.constant 0 : i32
    return %arg0, %c0_i32, %c0_i32_0 : i32, i32, i32
  }
  func.func @transform_2(%arg0: i32) -> (i32, i32, i32) {
    %c0_i32 = arith.constant 0 : i32
    %c0_i32_0 = arith.constant 0 : i32
    %c0_i32_1 = arith.constant 0 : i32
    return %arg0, %c0_i32, %c0_i32_0 : i32, i32, i32
  }
  func.func @transform_3(%arg0: i32) -> (i32, i32, i32) {
    %c0_i32 = arith.constant 0 : i32
    %c0_i32_0 = arith.constant 0 : i32
    %c0_i32_1 = arith.constant 0 : i32
    return %arg0, %c0_i32, %c0_i32_0 : i32, i32, i32
  }
  func.func @transform_4(%arg0: i32) -> (i32, i32, i32) {
    %c0_i32 = arith.constant 0 : i32
    %c0_i32_0 = arith.constant 0 : i32
    %c0_i32_1 = arith.constant 0 : i32
    %c0_i32_2 = arith.constant 0 : i32
    return %c0_i32, %c0_i32_0, %c0_i32_1 : i32, i32, i32
  }
  func.func @transform_5(%arg0: i32) -> (i32, i32, i32) {
    %c0_i32 = arith.constant 0 : i32
    %c0_i32_0 = arith.constant 0 : i32
    %c0_i32_1 = arith.constant 0 : i32
    %c0_i32_2 = arith.constant 0 : i32
    return %c0_i32, %c0_i32_0, %c0_i32_1 : i32, i32, i32
  }
  func.func @transform_6(%arg0: i32) -> (i32, i32, i32) {
    %c0_i32 = arith.constant 0 : i32
    %c0_i32_0 = arith.constant 0 : i32
    %c0_i32_1 = arith.constant 0 : i32
    %c0_i32_2 = arith.constant 0 : i32
    return %c0_i32, %c0_i32_0, %c0_i32_1 : i32, i32, i32
  }
  func.func @transform_7(%arg0: i32) -> (i32, i32, i32) {
    %c0_i32 = arith.constant 0 : i32
    %c0_i32_0 = arith.constant 0 : i32
    %c0_i32_1 = arith.constant 0 : i32
    %c0_i32_2 = arith.constant 0 : i32
    return %c0_i32, %c0_i32_0, %c0_i32_1 : i32, i32, i32
  }
  func.func @transform_8(%arg0: i32) -> (i32, i32, i32) {
    %c0_i32 = arith.constant 0 : i32
    %c0_i32_0 = arith.constant 0 : i32
    %c0_i32_1 = arith.constant 0 : i32
    %c0_i32_2 = arith.constant 0 : i32
    return %c0_i32, %c0_i32_0, %c0_i32_1 : i32, i32, i32
  }
  func.func @transform_9(%arg0: i32) -> (i32, i32, i32) {
    %c0_i32 = arith.constant 0 : i32
    %c0_i32_0 = arith.constant 0 : i32
    %c0_i32_1 = arith.constant 0 : i32
    %c0_i32_2 = arith.constant 0 : i32
    return %c0_i32, %c0_i32_0, %c0_i32_1 : i32, i32, i32
  }
  func.func @transform_10(%arg0: i32) -> (i32, i32, i32) {
    %c0_i32 = arith.constant 0 : i32
    %c0_i32_0 = arith.constant 0 : i32
    %c0_i32_1 = arith.constant 0 : i32
    %c0_i32_2 = arith.constant 0 : i32
    return %c0_i32, %c0_i32_0, %c0_i32_1 : i32, i32, i32
  }
  func.func @transform_11(%arg0: i32) -> (i32, i32) {
    %c0_i32 = arith.constant 0 : i32
    %c0_i32_0 = arith.constant 0 : i32
    %c0_i32_1 = arith.constant 0 : i32
    return %c0_i32, %c0_i32_0 : i32, i32
  }
  func.func @transform_12(%arg0: i32) -> (i32, i32) {
    %c0_i32 = arith.constant 0 : i32
    %c0_i32_0 = arith.constant 0 : i32
    %c0_i32_1 = arith.constant 0 : i32
    return %c0_i32, %c0_i32_0 : i32, i32
  }
  func.func @transform_13(%arg0: i32) -> (i32, i32) {
    %c0_i32 = arith.constant 0 : i32
    %c0_i32_0 = arith.constant 0 : i32
    %c0_i32_1 = arith.constant 0 : i32
    return %c0_i32, %c0_i32_0 : i32, i32
  }
  func.func @transform_14(%arg0: i32) -> (i32, i32) {
    %c0_i32 = arith.constant 0 : i32
    %c0_i32_0 = arith.constant 0 : i32
    %c0_i32_1 = arith.constant 0 : i32
    return %c0_i32, %c0_i32_0 : i32, i32
  }
  func.func @transform_15(%arg0: i32) -> (i32, i32) {
    %c0_i32 = arith.constant 0 : i32
    %c0_i32_0 = arith.constant 0 : i32
    %c0_i32_1 = arith.constant 0 : i32
    return %c0_i32, %c0_i32_0 : i32, i32
  }
  func.func @transform_16(%arg0: i32) -> (i32, i32) {
    %c0_i32 = arith.constant 0 : i32
    %c0_i32_0 = arith.constant 0 : i32
    %c0_i32_1 = arith.constant 0 : i32
    return %c0_i32, %c0_i32_0 : i32, i32
  }
  func.func @transform_17(%arg0: i32) -> (i32, i32) {
    %c0_i32 = arith.constant 0 : i32
    %c0_i32_0 = arith.constant 0 : i32
    %c0_i32_1 = arith.constant 0 : i32
    return %c0_i32, %c0_i32_0 : i32, i32
  }
  func.func @transform_18(%arg0: i32) -> (i32, i32) {
    %c0_i32 = arith.constant 0 : i32
    %c0_i32_0 = arith.constant 0 : i32
    %c0_i32_1 = arith.constant 0 : i32
    return %c0_i32, %c0_i32_0 : i32, i32
  }
  func.func @transform_19(%arg0: i32) -> (i32, i32) {
    %c0_i32 = arith.constant 0 : i32
    %c0_i32_0 = arith.constant 0 : i32
    %c0_i32_1 = arith.constant 0 : i32
    return %c0_i32, %c0_i32_0 : i32, i32
  }
  func.func @transform_20(%arg0: i32) -> (i32, i32) {
    %c0_i32 = arith.constant 0 : i32
    %c0_i32_0 = arith.constant 0 : i32
    %c0_i32_1 = arith.constant 0 : i32
    return %c0_i32, %c0_i32_0 : i32, i32
  }
  func.func @transform_21(%arg0: i32) -> (i32, i32) {
    %c0_i32 = arith.constant 0 : i32
    %c0_i32_0 = arith.constant 0 : i32
    %c0_i32_1 = arith.constant 0 : i32
    return %c0_i32, %c0_i32_0 : i32, i32
  }
  func.func @transform_22(%arg0: i32) -> (i32, i32, i32) {
    %c0_i32 = arith.constant 0 : i32
    %c0_i32_0 = arith.constant 0 : i32
    %c0_i32_1 = arith.constant 0 : i32
    return %arg0, %c0_i32, %c0_i32_0 : i32, i32, i32
  }
  func.func @transform_23(%arg0: i32) -> (i32, i32, i32) {
    %c0_i32 = arith.constant 0 : i32
    %c0_i32_0 = arith.constant 0 : i32
    %c0_i32_1 = arith.constant 0 : i32
    return %arg0, %c0_i32, %c0_i32_0 : i32, i32, i32
  }
}

</mosaic_0001>

<llo_original>
// kernel: transformer_decoder_layer.1
$region0: #{transformer_decoder_layer.1}
  #allocation0 [shape = 'u32[]', space=smem, size = 0x4, offset = 0x4, fixed_abs, tag = 'smem constant byte address 0x4 - core index']
  #allocation1 [shape = 'u32[72,128]{1,0:T(1,128)}', space=vmem, size = 0x9000, scoped, tag = 'internal scratch']
  %s0 = inlined_call_operand.vmem [shape: f32[2,8,32], index: 0, kind: input, shape index: {}]
  %s1 = inlined_call_operand.vmem [shape: f32[2,8,32], index: 1, kind: input, shape index: {}]
  %s2 = inlined_call_operand.vmem [shape: f32[2,8,32], index: 2, kind: input, shape index: {}]
  %s3 = inlined_call_operand.vmem [shape: f32[2,8,32], index: 3, kind: input, shape index: {}]
  %s4 = inlined_call_operand.vmem [shape: f32[4,32,8], index: 4, kind: input, shape index: {}]
  %s5 = inlined_call_operand.vmem [shape: f32[4,32,8], index: 5, kind: input, shape index: {}]
  %s6 = inlined_call_operand.vmem [shape: f32[4,32,8], index: 6, kind: input, shape index: {}]
  %s7 = inlined_call_operand.vmem [shape: f32[4,1,8], index: 7, kind: input, shape index: {}]
  %s8 = inlined_call_operand.vmem [shape: f32[4,1,8], index: 8, kind: input, shape index: {}]
  %s9 = inlined_call_operand.vmem [shape: f32[4,1,8], index: 9, kind: input, shape index: {}]
  %s10 = inlined_call_operand.vmem [shape: f32[4,8,32], index: 10, kind: input, shape index: {}]
  %s11 = inlined_call_operand.vmem [shape: f32[1,32], index: 11, kind: input, shape index: {}]
  %s12 = inlined_call_operand.vmem [shape: f32[32,64], index: 12, kind: input, shape index: {}]
  %s13 = inlined_call_operand.vmem [shape: f32[1,64], index: 13, kind: input, shape index: {}]
  %s14 = inlined_call_operand.vmem [shape: f32[64,32], index: 14, kind: input, shape index: {}]
  %s15 = inlined_call_operand.vmem [shape: f32[1,32], index: 15, kind: input, shape index: {}]
  %s16 = inlined_call_operand.vmem [shape: f32[1,32], index: 16, kind: input, shape index: {}]
  %s17 = inlined_call_operand.vmem [shape: f32[1,32], index: 17, kind: input, shape index: {}]
  %s18 = inlined_call_operand.vmem [shape: f32[1,32], index: 18, kind: input, shape index: {}]
  %s19 = inlined_call_operand.vmem [shape: f32[1,32], index: 19, kind: input, shape index: {}]
  %s20 = inlined_call_operand.vmem [shape: f32[1,32], index: 20, kind: input, shape index: {}]
  %s21 = inlined_call_operand.vmem [shape: f32[1,32], index: 21, kind: input, shape index: {}]
  %s22 = inlined_call_operand.vmem [shape: f32[2,8,32], index: 22, kind: output, shape index: {0}]
  %s23 = inlined_call_operand.hbm [shape: f32[2,8,8], index: 23, kind: output, shape index: {1}]
  %24 = xla_tuple %s22, %s23
  %s25 = sld [smem:[#allocation0]]
  $region106: #{transformer_decoder_layer.1} parent=0
    _
  %s27 = ssub.s32 1, %s25
  %s28 = scalar_select 0, %s27, %s25
  $region1: #{transformer_decoder_layer.1} parent=0
    #allocation2 [shape = 'u8[8192]{0}', space=vmem, size = 0x2000, scoped, tag = 'output window, operand 1, single buffered']
    #allocation3 [shape = 's32[1]{0}', space=sflag, size = 0x4, scoped, tag = 'scoped memory for transformer_decoder_layer.1']
    %29 = vsyncpa [#allocation3], 0
    // Predicated region
    $region2: #{transformer_decoder_layer.1} parent=1 // pred_check
      _
    $region3: #{transformer_decoder_layer.1} parent=1 // pred_check_branch
      %31 = sbr.rel (0) target = $region5
    $region4: #{transformer_decoder_layer.1} parent=1 // pred_region
      _
    $region5: #{transformer_decoder_layer.1} parent=1 // pred_fallthru
      _
    // Predicated region
    $region6: #{transformer_decoder_layer.1} parent=1 // pred_check
      _
    $region7: #{transformer_decoder_layer.1} parent=1 // pred_check_branch
      %33 = sbr.rel (0) target = $region9
    $region8: #{transformer_decoder_layer.1} parent=1 // pred_region
      _
    $region9: #{transformer_decoder_layer.1} parent=1 // pred_fallthru
      _
    // Predicated region
    $region10: #{transformer_decoder_layer.1} parent=1 // pred_check
      _
    $region11: #{transformer_decoder_layer.1} parent=1 // pred_check_branch
      %35 = sbr.rel (0) target = $region13
    $region12: #{transformer_decoder_layer.1} parent=1 // pred_region
      _
    $region13: #{transformer_decoder_layer.1} parent=1 // pred_fallthru
      _
    // Predicated region
    $region14: #{transformer_decoder_layer.1} parent=1 // pred_check
      _
    $region15: #{transformer_decoder_layer.1} parent=1 // pred_check_branch
      %37 = sbr.rel (0) target = $region17
    $region16: #{transformer_decoder_layer.1} parent=1 // pred_region
      _
    $region17: #{transformer_decoder_layer.1} parent=1 // pred_fallthru
      _
    // Predicated region
    $region18: #{transformer_decoder_layer.1} parent=1 // pred_check
      _
    $region19: #{transformer_decoder_layer.1} parent=1 // pred_check_branch
      %39 = sbr.rel (0) target = $region21
    $region20: #{transformer_decoder_layer.1} parent=1 // pred_region
      _
    $region21: #{transformer_decoder_layer.1} parent=1 // pred_fallthru
      _
    // Predicated region
    $region22: #{transformer_decoder_layer.1} parent=1 // pred_check
      _
    $region23: #{transformer_decoder_layer.1} parent=1 // pred_check_branch
      %41 = sbr.rel (0) target = $region25
    $region24: #{transformer_decoder_layer.1} parent=1 // pred_region
      _
    $region25: #{transformer_decoder_layer.1} parent=1 // pred_fallthru
      _
    // Predicated region
    $region26: #{transformer_decoder_layer.1} parent=1 // pred_check
      _
    $region27: #{transformer_decoder_layer.1} parent=1 // pred_check_branch
      %43 = sbr.rel (0) target = $region29
    $region28: #{transformer_decoder_layer.1} parent=1 // pred_region
      _
    $region29: #{transformer_decoder_layer.1} parent=1 // pred_fallthru
      _
    // Predicated region
    $region30: #{transformer_decoder_layer.1} parent=1 // pred_check
      _
    $region31: #{transformer_decoder_layer.1} parent=1 // pred_check_branch
      %45 = sbr.rel (0) target = $region33
    $region32: #{transformer_decoder_layer.1} parent=1 // pred_region
      _
    $region33: #{transformer_decoder_layer.1} parent=1 // pred_fallthru
      _
    // Predicated region
    $region34: #{transformer_decoder_layer.1} parent=1 // pred_check
      _
    $region35: #{transformer_decoder_layer.1} parent=1 // pred_check_branch
      %47 = sbr.rel (0) target = $region37
    $region36: #{transformer_decoder_layer.1} parent=1 // pred_region
      _
    $region37: #{transformer_decoder_layer.1} parent=1 // pred_fallthru
      _
    // Predicated region
    $region38: #{transformer_decoder_layer.1} parent=1 // pred_check
      _
    $region39: #{transformer_decoder_layer.1} parent=1 // pred_check_branch
      %49 = sbr.rel (0) target = $region41
    $region40: #{transformer_decoder_layer.1} parent=1 // pred_region
      _
    $region41: #{transformer_decoder_layer.1} parent=1 // pred_fallthru
      _
    // Predicated region
    $region42: #{transformer_decoder_layer.1} parent=1 // pred_check
      _
    $region43: #{transformer_decoder_layer.1} parent=1 // pred_check_branch
      %51 = sbr.rel (0) target = $region45
    $region44: #{transformer_decoder_layer.1} parent=1 // pred_region
      _
    $region45: #{transformer_decoder_layer.1} parent=1 // pred_fallthru
      _
    // Predicated region
    $region46: #{transformer_decoder_layer.1} parent=1 // pred_check
      _
    $region47: #{transformer_decoder_layer.1} parent=1 // pred_check_branch
      %53 = sbr.rel (0) target = $region49
    $region48: #{transformer_decoder_layer.1} parent=1 // pred_region
      _
    $region49: #{transformer_decoder_layer.1} parent=1 // pred_fallthru
      _
    // Predicated region
    $region50: #{transformer_decoder_layer.1} parent=1 // pred_check
      _
    $region51: #{transformer_decoder_layer.1} parent=1 // pred_check_branch
      %55 = sbr.rel (0) target = $region53
    $region52: #{transformer_decoder_layer.1} parent=1 // pred_region
      _
    $region53: #{transformer_decoder_layer.1} parent=1 // pred_fallthru
      _
    // Predicated region
    $region54: #{transformer_decoder_layer.1} parent=1 // pred_check
      _
    $region55: #{transformer_decoder_layer.1} parent=1 // pred_check_branch
      %57 = sbr.rel (0) target = $region57
    $region56: #{transformer_decoder_layer.1} parent=1 // pred_region
      _
    $region57: #{transformer_decoder_layer.1} parent=1 // pred_fallthru
      _
    // Predicated region
    $region58: #{transformer_decoder_layer.1} parent=1 // pred_check
      _
    $region59: #{transformer_decoder_layer.1} parent=1 // pred_check_branch
      %59 = sbr.rel (0) target = $region61
    $region60: #{transformer_decoder_layer.1} parent=1 // pred_region
      _
    $region61: #{transformer_decoder_layer.1} parent=1 // pred_fallthru
      _
    // Predicated region
    $region62: #{transformer_decoder_layer.1} parent=1 // pred_check
      _
    $region63: #{transformer_decoder_layer.1} parent=1 // pred_check_branch
      %61 = sbr.rel (0) target = $region65
    $region64: #{transformer_decoder_layer.1} parent=1 // pred_region
      _
    $region65: #{transformer_decoder_layer.1} parent=1 // pred_fallthru
      _
    // Predicated region
    $region66: #{transformer_decoder_layer.1} parent=1 // pred_check
      _
    $region67: #{transformer_decoder_layer.1} parent=1 // pred_check_branch
      %63 = sbr.rel (0) target = $region69
    $region68: #{transformer_decoder_layer.1} parent=1 // pred_region
      _
    $region69: #{transformer_decoder_layer.1} parent=1 // pred_fallthru
      _
    // Predicated region
    $region70: #{transformer_decoder_layer.1} parent=1 // pred_check
      _
    $region71: #{transformer_decoder_layer.1} parent=1 // pred_check_branch
      %65 = sbr.rel (0) target = $region73
    $region72: #{transformer_decoder_layer.1} parent=1 // pred_region
      _
    $region73: #{transformer_decoder_layer.1} parent=1 // pred_fallthru
      _
    // Predicated region
    $region74: #{transformer_decoder_layer.1} parent=1 // pred_check
      _
    $region75: #{transformer_decoder_layer.1} parent=1 // pred_check_branch
      %67 = sbr.rel (0) target = $region77
    $region76: #{transformer_decoder_layer.1} parent=1 // pred_region
      _
    $region77: #{transformer_decoder_layer.1} parent=1 // pred_fallthru
      _
    // Predicated region
    $region78: #{transformer_decoder_layer.1} parent=1 // pred_check
      _
    $region79: #{transformer_decoder_layer.1} parent=1 // pred_check_branch
      %69 = sbr.rel (0) target = $region81
    $region80: #{transformer_decoder_layer.1} parent=1 // pred_region
      _
    $region81: #{transformer_decoder_layer.1} parent=1 // pred_fallthru
      _
    // Predicated region
    $region82: #{transformer_decoder_layer.1} parent=1 // pred_check
      _
    $region83: #{transformer_decoder_layer.1} parent=1 // pred_check_branch
      %71 = sbr.rel (0) target = $region85
    $region84: #{transformer_decoder_layer.1} parent=1 // pred_region
      _
    $region85: #{transformer_decoder_layer.1} parent=1 // pred_fallthru
      _
    // Predicated region
    $region86: #{transformer_decoder_layer.1} parent=1 // pred_check
      _
    $region87: #{transformer_decoder_layer.1} parent=1 // pred_check_branch
      %73 = sbr.rel (0) target = $region89
    $region88: #{transformer_decoder_layer.1} parent=1 // pred_region
      _
    $region89: #{transformer_decoder_layer.1} parent=1 // pred_fallthru
      _
    %v74 = vld [vmem:[%s0] sm:$0xff]
    %v75 = vld [vmem:[%s0 + $0x8] sm:$0xff]
    %v76 = vld [vmem:[%s2] sm:$0xff]
    %v77 = vld [vmem:[%s2 + $0x8] sm:$0xff]
    %v78 = vld [vmem:[%s1] sm:$0xff]
    %v79 = vld [vmem:[%s1 + $0x8] sm:$0xff]
    %v80 = vld [vmem:[%s3] sm:$0xff]
    %v81 = vld [vmem:[%s3 + $0x8] sm:$0xff]
    %v82 = vld [vmem:[%s16] sm:$0x1]
    %v83 = vld [vmem:[%s17] sm:$0x1]
    %vm84 = vcmask 261120
    %v85 = vsel %vm84, %v74, 0.0
    %86 = vadd.xlane.f32.xlu0 %v85
    %v87 = vpop.xlane.xlu0 %86
    %v88 = vsel %vm84, %v75, 0.0
    %89 = vadd.xlane.f32.xlu0 %v88
    %v90 = vpop.xlane.xlu0 %89
    %v91 = vrcp.pop 32.0
    %v92 = vmul.f32 32.0, %v91
    %v93 = vsub.f32 1.0, %v92
    %v94 = vmul.f32 %v91, %v93
    %v95 = vadd.f32 %v91, %v94
    %vm96 = vweird.f32 %v91
    %v97 = vsel %vm96, %v91, %v95
    %v98 = vmul.f32 %v87, %v97
    %v99 = vmul.f32 %v90, %v97
    %v100 = vsub.f32 %v74, %v98
    %v101 = vsub.f32 %v75, %v99
    %v102 = vmul.f32 %v100, %v100
    %v103 = vmul.f32 %v101, %v101
    %v104 = vsel %vm84, %v102, 0.0
    %105 = vadd.xlane.f32.xlu0 %v104
    %v106 = vpop.xlane.xlu0 %105
    %v107 = vsel %vm84, %v103, 0.0
    %108 = vadd.xlane.f32.xlu0 %v107
    %v109 = vpop.xlane.xlu0 %108
    %v110 = vmul.f32 %v106, %v97
    %v111 = vmul.f32 %v109, %v97
    %v112 = vadd.f32 %v110, 1e-05
    %v113 = vadd.f32 %v111, 1e-05
    %v114 = vrsqrt.pop %v112
    %v115 = vmul.f32 %v114, %v112
    %v116 = vmul.f32 %v115, %v114
    %v117 = vmul.f32 0.5, %v116
    %v118 = vsub.f32 1.5, %v117
    %v119 = vmul.f32 %v114, %v118
    %vm120 = vweird.f32 %v112
    %vm121 = vweird.f32 %v114
    %vm122 = vmor %vm120, %vm121
    %v123 = vsel %vm122, %v114, %v119
    %v124 = vrsqrt.pop %v113
    %v125 = vmul.f32 %v124, %v113
    %v126 = vmul.f32 %v125, %v124
    %v127 = vmul.f32 0.5, %v126
    %v128 = vsub.f32 1.5, %v127
    %v129 = vmul.f32 %v124, %v128
    %vm130 = vweird.f32 %v113
    %vm131 = vweird.f32 %v124
    %vm132 = vmor %vm130, %vm131
    %v133 = vsel %vm132, %v124, %v129
    %v134 = vmul.f32 %v100, %v123
    %v135 = vmul.f32 %v101, %v133
    %v137 = vperm.slane %v82, 0
    %v139 = vmul.f32 %v134, %v137
    %v140 = vmul.f32 %v135, %v137
    %v142 = vperm.slane %v83, 0
    %v144 = vadd.f32 %v139, %v142
    %v145 = vadd.f32 %v140, %v142
    %v146 = vadd.f32 %v144, %v76
    %v147 = vadd.f32 %v145, %v77
    %v148 = vadd.f32 %v78, %v80
    %v149 = vadd.f32 %v79, %v81
    %v150 = vld [vmem:[%s4] sm:$0xff]
    %v151 = vld [vmem:[%s4 + $0x8] sm:$0xff]
    %v152 = vld [vmem:[%s4 + $0x10] sm:$0xff]
    %v153 = vld [vmem:[%s4 + $0x18] sm:$0xff]
    %v154 = vld [vmem:[%s7] sm:$0x1]
    %v156 = vperm.slane %v154, 0
    %v159 = vsel %vm84, %v146, 0
    %v162 = vsel %vm84, %v147, 0
    %164 = vmatpush.msra.mxu0 0.0
    %165 = vmatpush.msra.mxu0 0.0
    %166 = vmatpush.msra.mxu0 0.0
    %167 = vmatpush.msra.mxu0 0.0
    %168 = vmatpush.msra.mxu0 0.0
    %169 = vmatpush.msra.mxu0 0.0
    %170 = vmatpush.msra.mxu0 0.0
    %171 = vmatpush.msra.mxu0 0.0
    %172 = vmatpush.msra.mxu0 0.0
    %173 = vmatpush.msra.mxu0 0.0
    %174 = vmatpush.msra.mxu0 0.0
    %175 = vmatpush.msra.mxu0 0.0
    %176 = vmatpush.msra.mxu0 %v153
    %177 = vmatpush.msra.mxu0 %v152
    %178 = vmatpush.msra.mxu0 %v151
    %179 = vmatpush.msra.mxu0 %v150
    %180 = vmatmul.f32.gmra.mxu0 %v159
    %v181 = vpop.f32.mrf.mxu0
    %v182 = vadd.f32 %v156, %v181
    %183 = vmatmul.f32.gmra.mxu0 %v162
    %v184 = vpop.f32.mrf.mxu0
    %v185 = vadd.f32 %v156, %v184
    %186 = vdwg.mxu0
    %v187 = vmul.f32 %v182, 0.35355338
    %v188 = vmul.f32 %v185, 0.35355338
    %v189 = vld [vmem:[%s5] sm:$0xff]
    %v190 = vld [vmem:[%s5 + $0x8] sm:$0xff]
    %v191 = vld [vmem:[%s5 + $0x10] sm:$0xff]
    %v192 = vld [vmem:[%s5 + $0x18] sm:$0xff]
    %v193 = vld [vmem:[%s8] sm:$0x1]
    %v195 = vperm.slane %v193, 0
    %v198 = vsel %vm84, %v148, 0
    %v201 = vsel %vm84, %v149, 0
    %203 = vmatpush.msra.mxu0 0.0
    %204 = vmatpush.msra.mxu0 0.0
    %205 = vmatpush.msra.mxu0 0.0
    %206 = vmatpush.msra.mxu0 0.0
    %207 = vmatpush.msra.mxu0 0.0
    %208 = vmatpush.msra.mxu0 0.0
    %209 = vmatpush.msra.mxu0 0.0
    %210 = vmatpush.msra.mxu0 0.0
    %211 = vmatpush.msra.mxu0 0.0
    %212 = vmatpush.msra.mxu0 0.0
    %213 = vmatpush.msra.mxu0 0.0
    %214 = vmatpush.msra.mxu0 0.0
    %215 = vmatpush.msra.mxu0 %v192
    %216 = vmatpush.msra.mxu0 %v191
    %217 = vmatpush.msra.mxu0 %v190
    %218 = vmatpush.msra.mxu0 %v189
    %219 = vmatmul.f32.gmra.mxu0 %v198
    %v220 = vpop.f32.mrf.mxu0
    %v221 = vadd.f32 %v195, %v220
    %222 = vmatmul.f32.gmra.mxu0 %v201
    %v223 = vpop.f32.mrf.mxu0
    %v224 = vadd.f32 %v195, %v223
    %225 = vdwg.mxu0
    %v226 = vld [vmem:[%s6] sm:$0xff]
    %v227 = vld [vmem:[%s6 + $0x8] sm:$0xff]
    %v228 = vld [vmem:[%s6 + $0x10] sm:$0xff]
    %v229 = vld [vmem:[%s6 + $0x18] sm:$0xff]
    %v230 = vld [vmem:[%s9] sm:$0x1]
    %v232 = vperm.slane %v230, 0
    %v235 = vsel %vm84, %v78, 0
    %v238 = vsel %vm84, %v79, 0
    %240 = vmatpush.msra.mxu0 0.0
    %241 = vmatpush.msra.mxu0 0.0
    %242 = vmatpush.msra.mxu0 0.0
    %243 = vmatpush.msra.mxu0 0.0
    %244 = vmatpush.msra.mxu0 0.0
    %245 = vmatpush.msra.mxu0 0.0
    %246 = vmatpush.msra.mxu0 0.0
    %247 = vmatpush.msra.mxu0 0.0
    %248 = vmatpush.msra.mxu0 0.0
    %249 = vmatpush.msra.mxu0 0.0
    %250 = vmatpush.msra.mxu0 0.0
    %251 = vmatpush.msra.mxu0 0.0
    %252 = vmatpush.msra.mxu0 %v229
    %253 = vmatpush.msra.mxu0 %v228
    %254 = vmatpush.msra.mxu0 %v227
    %255 = vmatpush.msra.mxu0 %v226
    %256 = vmatmul.f32.gmra.mxu0 %v235
    %v257 = vpop.f32.mrf.mxu0
    %v258 = vadd.f32 %v232, %v257
    %259 = vmatmul.f32.gmra.mxu0 %v238
    %v260 = vpop.f32.mrf.mxu0
    %v261 = vadd.f32 %v232, %v260
    %262 = vdwg.mxu0
    %vm263 = vcmask 64512
    %v265 = vsel %vm263, %v187, 0
    %v268 = vsel %vm263, %v221, 0
    %270 = vmatpush.xpose.msra.mxu0 0.0
    %271 = vmatpush.xpose.msra.mxu0 0.0
    %272 = vmatpush.xpose.msra.mxu0 0.0
    %273 = vmatpush.xpose.msra.mxu0 0.0
    %274 = vmatpush.xpose.msra.mxu0 0.0
    %275 = vmatpush.xpose.msra.mxu0 0.0
    %276 = vmatpush.xpose.msra.mxu0 0.0
    %277 = vmatpush.xpose.msra.mxu0 0.0
    %278 = vmatpush.xpose.msra.mxu0 0.0
    %279 = vmatpush.xpose.msra.mxu0 0.0
    %280 = vmatpush.xpose.msra.mxu0 0.0
    %281 = vmatpush.xpose.msra.mxu0 0.0
    %282 = vmatpush.xpose.msra.mxu0 0.0
    %283 = vmatpush.xpose.msra.mxu0 0.0
    %284 = vmatpush.xpose.msra.mxu0 0.0
    %285 = vmatpush.xpose.msra.mxu0 %v268
    %286 = vmatmul.f32.gmra.mxu0 %v265
    %v287 = vpop.f32.mrf.mxu0
    %v288 = vadd.f32 0.0, %v287
    %289 = vdwg.mxu0
    %v291 = vsel %vm263, %v188, 0
    %v294 = vsel %vm263, %v224, 0
    %296 = vmatpush.xpose.msra.mxu0 0.0
    %297 = vmatpush.xpose.msra.mxu0 0.0
    %298 = vmatpush.xpose.msra.mxu0 0.0
    %299 = vmatpush.xpose.msra.mxu0 0.0
    %300 = vmatpush.xpose.msra.mxu0 0.0
    %301 = vmatpush.xpose.msra.mxu0 0.0
    %302 = vmatpush.xpose.msra.mxu0 0.0
    %303 = vmatpush.xpose.msra.mxu0 0.0
    %304 = vmatpush.xpose.msra.mxu0 0.0
    %305 = vmatpush.xpose.msra.mxu0 0.0
    %306 = vmatpush.xpose.msra.mxu0 0.0
    %307 = vmatpush.xpose.msra.mxu0 0.0
    %308 = vmatpush.xpose.msra.mxu0 0.0
    %309 = vmatpush.xpose.msra.mxu0 0.0
    %310 = vmatpush.xpose.msra.mxu0 0.0
    %311 = vmatpush.xpose.msra.mxu0 %v294
    %312 = vmatmul.f32.gmra.mxu0 %v291
    %v313 = vpop.f32.mrf.mxu0
    %v314 = vadd.f32 0.0, %v313
    %315 = vdwg.mxu0
    %v316 = vsel %vm263, %v288, -inf
    %317 = vmax.xlane.f32.xlu0 %v316
    %v318 = vpop.xlane.xlu0 %317
    %v319 = vsel %vm263, %v314, -inf
    %320 = vmax.xlane.f32.xlu0 %v319
    %v321 = vpop.xlane.xlu0 %320
    %v322 = vsub.f32 %v288, %v318
    %v323 = vsub.f32 %v314, %v321
    %v324 = vmul.f32 %v322, 1.442695
    %v325 = vpow.pop %v324
    %v326 = vmul.f32 %v323, 1.442695
    %v327 = vpow.pop %v326
    %v328 = vsel %vm263, %v325, 0.0
    %329 = vadd.xlane.f32.xlu0 %v328
    %v330 = vpop.xlane.xlu0 %329
    %v331 = vsel %vm263, %v327, 0.0
    %332 = vadd.xlane.f32.xlu0 %v331
    %v333 = vpop.xlane.xlu0 %332
    %v334 = vrcp.pop %v330
    %v335 = vmul.f32 %v330, %v334
    %v336 = vsub.f32 1.0, %v335
    %v337 = vmul.f32 %v334, %v336
    %v338 = vadd.f32 %v334, %v337
    %vm339 = vweird.f32 %v330
    %vm340 = vweird.f32 %v334
    %vm341 = vmor %vm339, %vm340
    %v342 = vsel %vm341, %v334, %v338
    %v343 = vand.u32 2147483647, %v330
    %vm344 = vcmp.eq.f32.partialorder %v343, 8.507059e+37
    %v345 = vand.u32 %v330, 2147483648
    %v346 = vor.u32 1.1754944e-38, %v345
    %v347 = vsel %vm344, %v346, %v342
    %v348 = vrcp.pop %v333
    %v349 = vmul.f32 %v333, %v348
    %v350 = vsub.f32 1.0, %v349
    %v351 = vmul.f32 %v348, %v350
    %v352 = vadd.f32 %v348, %v351
    %vm353 = vweird.f32 %v333
    %vm354 = vweird.f32 %v348
    %vm355 = vmor %vm353, %vm354
    %v356 = vsel %vm355, %v348, %v352
    %v357 = vand.u32 2147483647, %v333
    %vm358 = vcmp.eq.f32.partialorder %v357, 8.507059e+37
    %v359 = vand.u32 %v333, 2147483648
    %v360 = vor.u32 1.1754944e-38, %v359
    %v361 = vsel %vm358, %v360, %v356
    %v362 = vmul.f32 %v325, %v347
    %v363 = vmul.f32 %v327, %v361
    %v364 = vadd.f32 %v362, 0.0
    %v365 = vadd.f32 %v363, 0.0
    %v367 = vsel %vm263, %v362, 0
    %369 = vmatpush.msra.mxu0 0.0
    %370 = vmatpush.msra.mxu0 0.0
    %371 = vmatpush.msra.mxu0 0.0
    %372 = vmatpush.msra.mxu0 0.0
    %373 = vmatpush.msra.mxu0 0.0
    %374 = vmatpush.msra.mxu0 0.0
    %375 = vmatpush.msra.mxu0 0.0
    %376 = vmatpush.msra.mxu0 0.0
    %377 = vmatpush.msra.mxu0 0.0
    %378 = vmatpush.msra.mxu0 0.0
    %379 = vmatpush.msra.mxu0 0.0
    %380 = vmatpush.msra.mxu0 0.0
    %381 = vmatpush.msra.mxu0 0.0
    %382 = vmatpush.msra.mxu0 0.0
    %383 = vmatpush.msra.mxu0 0.0
    %384 = vmatpush.msra.mxu0 %v258
    %385 = vmatmul.f32.gmra.mxu0 %v367
    %v386 = vpop.f32.mrf.mxu0
    %v387 = vadd.f32 0.0, %v386
    %388 = vdwg.mxu0
    %v390 = vsel %vm263, %v363, 0
    %392 = vmatpush.msra.mxu0 0.0
    %393 = vmatpush.msra.mxu0 0.0
    %394 = vmatpush.msra.mxu0 0.0
    %395 = vmatpush.msra.mxu0 0.0
    %396 = vmatpush.msra.mxu0 0.0
    %397 = vmatpush.msra.mxu0 0.0
    %398 = vmatpush.msra.mxu0 0.0
    %399 = vmatpush.msra.mxu0 0.0
    %400 = vmatpush.msra.mxu0 0.0
    %401 = vmatpush.msra.mxu0 0.0
    %402 = vmatpush.msra.mxu0 0.0
    %403 = vmatpush.msra.mxu0 0.0
    %404 = vmatpush.msra.mxu0 0.0
    %405 = vmatpush.msra.mxu0 0.0
    %406 = vmatpush.msra.mxu0 0.0
    %407 = vmatpush.msra.mxu0 %v261
    %408 = vmatmul.f32.gmra.mxu0 %v390
    %v409 = vpop.f32.mrf.mxu0
    %v410 = vadd.f32 0.0, %v409
    %411 = vdwg.mxu0
    %v412 = vld [vmem:[%s10] sm:$0xff]
    %s413 = scalar_lea.vmem %s4, 32
    %v414 = vld [vmem:[%s413] sm:$0xff]
    %v415 = vld [vmem:[%s413 + $0x8] sm:$0xff]
    %v416 = vld [vmem:[%s413 + $0x10] sm:$0xff]
    %v417 = vld [vmem:[%s413 + $0x18] sm:$0xff]
    %s418 = scalar_lea.vmem %s7, 1
    %v419 = vld [vmem:[%s418] sm:$0x1]
    %v421 = vperm.slane %v419, 0
    %423 = vmatpush.msra.mxu0 0.0
    %424 = vmatpush.msra.mxu0 0.0
    %425 = vmatpush.msra.mxu0 0.0
    %426 = vmatpush.msra.mxu0 0.0
    %427 = vmatpush.msra.mxu0 0.0
    %428 = vmatpush.msra.mxu0 0.0
    %429 = vmatpush.msra.mxu0 0.0
    %430 = vmatpush.msra.mxu0 0.0
    %431 = vmatpush.msra.mxu0 0.0
    %432 = vmatpush.msra.mxu0 0.0
    %433 = vmatpush.msra.mxu0 0.0
    %434 = vmatpush.msra.mxu0 0.0
    %435 = vmatpush.msra.mxu0 %v417
    %436 = vmatpush.msra.mxu0 %v416
    %437 = vmatpush.msra.mxu0 %v415
    %438 = vmatpush.msra.mxu0 %v414
    %439 = vmatmul.f32.gmra.mxu0 %v159
    %v440 = vpop.f32.mrf.mxu0
    %v441 = vadd.f32 %v421, %v440
    %442 = vmatmul.f32.gmra.mxu0 %v162
    %v443 = vpop.f32.mrf.mxu0
    %v444 = vadd.f32 %v421, %v443
    %445 = vdwg.mxu0
    %v446 = vmul.f32 %v441, 0.35355338
    %v447 = vmul.f32 %v444, 0.35355338
    %s448 = scalar_lea.vmem %s5, 32
    %v449 = vld [vmem:[%s448] sm:$0xff]
    %v450 = vld [vmem:[%s448 + $0x8] sm:$0xff]
    %v451 = vld [vmem:[%s448 + $0x10] sm:$0xff]
    %v452 = vld [vmem:[%s448 + $0x18] sm:$0xff]
    %s453 = scalar_lea.vmem %s8, 1
    %v454 = vld [vmem:[%s453] sm:$0x1]
    %v456 = vperm.slane %v454, 0
    %458 = vmatpush.msra.mxu0 0.0
    %459 = vmatpush.msra.mxu0 0.0
    %460 = vmatpush.msra.mxu0 0.0
    %461 = vmatpush.msra.mxu0 0.0
    %462 = vmatpush.msra.mxu0 0.0
    %463 = vmatpush.msra.mxu0 0.0
    %464 = vmatpush.msra.mxu0 0.0
    %465 = vmatpush.msra.mxu0 0.0
    %466 = vmatpush.msra.mxu0 0.0
    %467 = vmatpush.msra.mxu0 0.0
    %468 = vmatpush.msra.mxu0 0.0
    %469 = vmatpush.msra.mxu0 0.0
    %470 = vmatpush.msra.mxu0 %v452
    %471 = vmatpush.msra.mxu0 %v451
    %472 = vmatpush.msra.mxu0 %v450
    %473 = vmatpush.msra.mxu0 %v449
    %474 = vmatmul.f32.gmra.mxu0 %v198
    %v475 = vpop.f32.mrf.mxu0
    %v476 = vadd.f32 %v456, %v475
    %477 = vmatmul.f32.gmra.mxu0 %v201
    %v478 = vpop.f32.mrf.mxu0
    %v479 = vadd.f32 %v456, %v478
    %480 = vdwg.mxu0
    %s481 = scalar_lea.vmem %s6, 32
    %v482 = vld [vmem:[%s481] sm:$0xff]
    %v483 = vld [vmem:[%s481 + $0x8] sm:$0xff]
    %v484 = vld [vmem:[%s481 + $0x10] sm:$0xff]
    %v485 = vld [vmem:[%s481 + $0x18] sm:$0xff]
    %s486 = scalar_lea.vmem %s9, 1
    %v487 = vld [vmem:[%s486] sm:$0x1]
    %v489 = vperm.slane %v487, 0
    %491 = vmatpush.msra.mxu0 0.0
    %492 = vmatpush.msra.mxu0 0.0
    %493 = vmatpush.msra.mxu0 0.0
    %494 = vmatpush.msra.mxu0 0.0
    %495 = vmatpush.msra.mxu0 0.0
    %496 = vmatpush.msra.mxu0 0.0
    %497 = vmatpush.msra.mxu0 0.0
    %498 = vmatpush.msra.mxu0 0.0
    %499 = vmatpush.msra.mxu0 0.0
    %500 = vmatpush.msra.mxu0 0.0
    %501 = vmatpush.msra.mxu0 0.0
    %502 = vmatpush.msra.mxu0 0.0
    %503 = vmatpush.msra.mxu0 %v485
    %504 = vmatpush.msra.mxu0 %v484
    %505 = vmatpush.msra.mxu0 %v483
    %506 = vmatpush.msra.mxu0 %v482
    %507 = vmatmul.f32.gmra.mxu0 %v235
    %v508 = vpop.f32.mrf.mxu0
    %v509 = vadd.f32 %v489, %v508
    %510 = vmatmul.f32.gmra.mxu0 %v238
    %v511 = vpop.f32.mrf.mxu0
    %v512 = vadd.f32 %v489, %v511
    %513 = vdwg.mxu0
    %v515 = vsel %vm263, %v446, 0
    %v518 = vsel %vm263, %v476, 0
    %520 = vmatpush.xpose.msra.mxu0 0.0
    %521 = vmatpush.xpose.msra.mxu0 0.0
    %522 = vmatpush.xpose.msra.mxu0 0.0
    %523 = vmatpush.xpose.msra.mxu0 0.0
    %524 = vmatpush.xpose.msra.mxu0 0.0
    %525 = vmatpush.xpose.msra.mxu0 0.0
    %526 = vmatpush.xpose.msra.mxu0 0.0
    %527 = vmatpush.xpose.msra.mxu0 0.0
    %528 = vmatpush.xpose.msra.mxu0 0.0
    %529 = vmatpush.xpose.msra.mxu0 0.0
    %530 = vmatpush.xpose.msra.mxu0 0.0
    %531 = vmatpush.xpose.msra.mxu0 0.0
    %532 = vmatpush.xpose.msra.mxu0 0.0
    %533 = vmatpush.xpose.msra.mxu0 0.0
    %534 = vmatpush.xpose.msra.mxu0 0.0
    %535 = vmatpush.xpose.msra.mxu0 %v518
    %536 = vmatmul.f32.gmra.mxu0 %v515
    %v537 = vpop.f32.mrf.mxu0
    %v538 = vadd.f32 0.0, %v537
    %539 = vdwg.mxu0
    %v541 = vsel %vm263, %v447, 0
    %v544 = vsel %vm263, %v479, 0
    %546 = vmatpush.xpose.msra.mxu0 0.0
    %547 = vmatpush.xpose.msra.mxu0 0.0
    %548 = vmatpush.xpose.msra.mxu0 0.0
    %549 = vmatpush.xpose.msra.mxu0 0.0
    %550 = vmatpush.xpose.msra.mxu0 0.0
    %551 = vmatpush.xpose.msra.mxu0 0.0
    %552 = vmatpush.xpose.msra.mxu0 0.0
    %553 = vmatpush.xpose.msra.mxu0 0.0
    %554 = vmatpush.xpose.msra.mxu0 0.0
    %555 = vmatpush.xpose.msra.mxu0 0.0
    %556 = vmatpush.xpose.msra.mxu0 0.0
    %557 = vmatpush.xpose.msra.mxu0 0.0
    %558 = vmatpush.xpose.msra.mxu0 0.0
    %559 = vmatpush.xpose.msra.mxu0 0.0
    %560 = vmatpush.xpose.msra.mxu0 0.0
    %561 = vmatpush.xpose.msra.mxu0 %v544
    %562 = vmatmul.f32.gmra.mxu0 %v541
    %v563 = vpop.f32.mrf.mxu0
    %v564 = vadd.f32 0.0, %v563
    %565 = vdwg.mxu0
    %v566 = vsel %vm263, %v538, -inf
    %567 = vmax.xlane.f32.xlu0 %v566
    %v568 = vpop.xlane.xlu0 %567
    %v569 = vsel %vm263, %v564, -inf
    %570 = vmax.xlane.f32.xlu0 %v569
    %v571 = vpop.xlane.xlu0 %570
    %v572 = vsub.f32 %v538, %v568
    %v573 = vsub.f32 %v564, %v571
    %v574 = vmul.f32 %v572, 1.442695
    %v575 = vpow.pop %v574
    %v576 = vmul.f32 %v573, 1.442695
    %v577 = vpow.pop %v576
    %v578 = vsel %vm263, %v575, 0.0
    %579 = vadd.xlane.f32.xlu0 %v578
    %v580 = vpop.xlane.xlu0 %579
    %v581 = vsel %vm263, %v577, 0.0
    %582 = vadd.xlane.f32.xlu0 %v581
    %v583 = vpop.xlane.xlu0 %582
    %v584 = vrcp.pop %v580
    %v585 = vmul.f32 %v580, %v584
    %v586 = vsub.f32 1.0, %v585
    %v587 = vmul.f32 %v584, %v586
    %v588 = vadd.f32 %v584, %v587
    %vm589 = vweird.f32 %v580
    %vm590 = vweird.f32 %v584
    %vm591 = vmor %vm589, %vm590
    %v592 = vsel %vm591, %v584, %v588
    %v593 = vand.u32 2147483647, %v580
    %vm594 = vcmp.eq.f32.partialorder %v593, 8.507059e+37
    %v595 = vand.u32 %v580, 2147483648
    %v596 = vor.u32 1.1754944e-38, %v595
    %v597 = vsel %vm594, %v596, %v592
    %v598 = vrcp.pop %v583
    %v599 = vmul.f32 %v583, %v598
    %v600 = vsub.f32 1.0, %v599
    %v601 = vmul.f32 %v598, %v600
    %v602 = vadd.f32 %v598, %v601
    %vm603 = vweird.f32 %v583
    %vm604 = vweird.f32 %v598
    %vm605 = vmor %vm603, %vm604
    %v606 = vsel %vm605, %v598, %v602
    %v607 = vand.u32 2147483647, %v583
    %vm608 = vcmp.eq.f32.partialorder %v607, 8.507059e+37
    %v609 = vand.u32 %v583, 2147483648
    %v610 = vor.u32 1.1754944e-38, %v609
    %v611 = vsel %vm608, %v610, %v606
    %v612 = vmul.f32 %v575, %v597
    %v613 = vmul.f32 %v577, %v611
    %v614 = vadd.f32 %v364, %v612
    %v615 = vadd.f32 %v365, %v613
    %v617 = vsel %vm263, %v612, 0
    %619 = vmatpush.msra.mxu0 0.0
    %620 = vmatpush.msra.mxu0 0.0
    %621 = vmatpush.msra.mxu0 0.0
    %622 = vmatpush.msra.mxu0 0.0
    %623 = vmatpush.msra.mxu0 0.0
    %624 = vmatpush.msra.mxu0 0.0
    %625 = vmatpush.msra.mxu0 0.0
    %626 = vmatpush.msra.mxu0 0.0
    %627 = vmatpush.msra.mxu0 0.0
    %628 = vmatpush.msra.mxu0 0.0
    %629 = vmatpush.msra.mxu0 0.0
    %630 = vmatpush.msra.mxu0 0.0
    %631 = vmatpush.msra.mxu0 0.0
    %632 = vmatpush.msra.mxu0 0.0
    %633 = vmatpush.msra.mxu0 0.0
    %634 = vmatpush.msra.mxu0 %v509
    %635 = vmatmul.f32.gmra.mxu0 %v617
    %v636 = vpop.f32.mrf.mxu0
    %v637 = vadd.f32 0.0, %v636
    %638 = vdwg.mxu0
    %v640 = vsel %vm263, %v613, 0
    %642 = vmatpush.msra.mxu0 0.0
    %643 = vmatpush.msra.mxu0 0.0
    %644 = vmatpush.msra.mxu0 0.0
    %645 = vmatpush.msra.mxu0 0.0
    %646 = vmatpush.msra.mxu0 0.0
    %647 = vmatpush.msra.mxu0 0.0
    %648 = vmatpush.msra.mxu0 0.0
    %649 = vmatpush.msra.mxu0 0.0
    %650 = vmatpush.msra.mxu0 0.0
    %651 = vmatpush.msra.mxu0 0.0
    %652 = vmatpush.msra.mxu0 0.0
    %653 = vmatpush.msra.mxu0 0.0
    %654 = vmatpush.msra.mxu0 0.0
    %655 = vmatpush.msra.mxu0 0.0
    %656 = vmatpush.msra.mxu0 0.0
    %657 = vmatpush.msra.mxu0 %v512
    %658 = vmatmul.f32.gmra.mxu0 %v640
    %v659 = vpop.f32.mrf.mxu0
    %v660 = vadd.f32 0.0, %v659
    %661 = vdwg.mxu0
    %s662 = scalar_lea.vmem %s10, 8
    %v663 = vld [vmem:[%s662] sm:$0xff]
    %v665 = vsel %vm263, %v637, 0
    %v668 = vsel %vm263, %v660, 0
    %670 = vmatpush.msra.mxu0 0.0
    %671 = vmatpush.msra.mxu0 0.0
    %672 = vmatpush.msra.mxu0 0.0
    %673 = vmatpush.msra.mxu0 0.0
    %674 = vmatpush.msra.mxu0 0.0
    %675 = vmatpush.msra.mxu0 0.0
    %676 = vmatpush.msra.mxu0 0.0
    %677 = vmatpush.msra.mxu0 0.0
    %678 = vmatpush.msra.mxu0 0.0
    %679 = vmatpush.msra.mxu0 0.0
    %680 = vmatpush.msra.mxu0 0.0
    %681 = vmatpush.msra.mxu0 0.0
    %682 = vmatpush.msra.mxu0 0.0
    %683 = vmatpush.msra.mxu0 0.0
    %684 = vmatpush.msra.mxu0 0.0
    %685 = vmatpush.msra.mxu0 %v663
    %686 = vmatmul.f32.gmra.mxu0 %v665
    %v687 = vpop.f32.mrf.mxu0
    %v688 = vadd.f32 0.0, %v687
    %689 = vmatmul.f32.gmra.mxu0 %v668
    %v690 = vpop.f32.mrf.mxu0
    %v691 = vadd.f32 0.0, %v690
    %692 = vdwg.mxu0
    %v694 = vsel %vm263, %v387, 0
    %v697 = vsel %vm263, %v410, 0
    %699 = vmatpush.msra.mxu0 0.0
    %700 = vmatpush.msra.mxu0 0.0
    %701 = vmatpush.msra.mxu0 0.0
    %702 = vmatpush.msra.mxu0 0.0
    %703 = vmatpush.msra.mxu0 0.0
    %704 = vmatpush.msra.mxu0 0.0
    %705 = vmatpush.msra.mxu0 0.0
    %706 = vmatpush.msra.mxu0 0.0
    %707 = vmatpush.msra.mxu0 0.0
    %708 = vmatpush.msra.mxu0 0.0
    %709 = vmatpush.msra.mxu0 0.0
    %710 = vmatpush.msra.mxu0 0.0
    %711 = vmatpush.msra.mxu0 0.0
    %712 = vmatpush.msra.mxu0 0.0
    %713 = vmatpush.msra.mxu0 0.0
    %714 = vmatpush.msra.mxu0 %v412
    %715 = vmatmul.f32.gmra.mxu0 %v694
    %v716 = vpop.f32.mrf.mxu0
    %v717 = vadd.f32 %v688, %v716
    %718 = vmatmul.f32.gmra.mxu0 %v697
    %v719 = vpop.f32.mrf.mxu0
    %v720 = vadd.f32 %v691, %v719
    %721 = vdwg.mxu0
    %s722 = scalar_lea.vmem %s4, 64
    %v723 = vld [vmem:[%s722] sm:$0xff]
    %v724 = vld [vmem:[%s722 + $0x8] sm:$0xff]
    %v725 = vld [vmem:[%s722 + $0x10] sm:$0xff]
    %v726 = vld [vmem:[%s722 + $0x18] sm:$0xff]
    %s727 = scalar_lea.vmem %s7, 2
    %v728 = vld [vmem:[%s727] sm:$0x1]
    %v730 = vperm.slane %v728, 0
    %732 = vmatpush.msra.mxu0 0.0
    %733 = vmatpush.msra.mxu0 0.0
    %734 = vmatpush.msra.mxu0 0.0
    %735 = vmatpush.msra.mxu0 0.0
    %736 = vmatpush.msra.mxu0 0.0
    %737 = vmatpush.msra.mxu0 0.0
    %738 = vmatpush.msra.mxu0 0.0
    %739 = vmatpush.msra.mxu0 0.0
    %740 = vmatpush.msra.mxu0 0.0
    %741 = vmatpush.msra.mxu0 0.0
    %742 = vmatpush.msra.mxu0 0.0
    %743 = vmatpush.msra.mxu0 0.0
    %744 = vmatpush.msra.mxu0 %v726
    %745 = vmatpush.msra.mxu0 %v725
    %746 = vmatpush.msra.mxu0 %v724
    %747 = vmatpush.msra.mxu0 %v723
    %748 = vmatmul.f32.gmra.mxu0 %v159
    %v749 = vpop.f32.mrf.mxu0
    %v750 = vadd.f32 %v730, %v749
    %751 = vmatmul.f32.gmra.mxu0 %v162
    %v752 = vpop.f32.mrf.mxu0
    %v753 = vadd.f32 %v730, %v752
    %754 = vdwg.mxu0
    %v755 = vmul.f32 %v750, 0.35355338
    %v756 = vmul.f32 %v753, 0.35355338
    %s757 = scalar_lea.vmem %s5, 64
    %v758 = vld [vmem:[%s757] sm:$0xff]
    %v759 = vld [vmem:[%s757 + $0x8] sm:$0xff]
    %v760 = vld [vmem:[%s757 + $0x10] sm:$0xff]
    %v761 = vld [vmem:[%s757 + $0x18] sm:$0xff]
    %s762 = scalar_lea.vmem %s8, 2
    %v763 = vld [vmem:[%s762] sm:$0x1]
    %v765 = vperm.slane %v763, 0
    %767 = vmatpush.msra.mxu0 0.0
    %768 = vmatpush.msra.mxu0 0.0
    %769 = vmatpush.msra.mxu0 0.0
    %770 = vmatpush.msra.mxu0 0.0
    %771 = vmatpush.msra.mxu0 0.0
    %772 = vmatpush.msra.mxu0 0.0
    %773 = vmatpush.msra.mxu0 0.0
    %774 = vmatpush.msra.mxu0 0.0
    %775 = vmatpush.msra.mxu0 0.0
    %776 = vmatpush.msra.mxu0 0.0
    %777 = vmatpush.msra.mxu0 0.0
    %778 = vmatpush.msra.mxu0 0.0
    %779 = vmatpush.msra.mxu0 %v761
    %780 = vmatpush.msra.mxu0 %v760
    %781 = vmatpush.msra.mxu0 %v759
    %782 = vmatpush.msra.mxu0 %v758
    %783 = vmatmul.f32.gmra.mxu0 %v198
    %v784 = vpop.f32.mrf.mxu0
    %v785 = vadd.f32 %v765, %v784
    %786 = vmatmul.f32.gmra.mxu0 %v201
    %v787 = vpop.f32.mrf.mxu0
    %v788 = vadd.f32 %v765, %v787
    %789 = vdwg.mxu0
    %s790 = scalar_lea.vmem %s6, 64
    %v791 = vld [vmem:[%s790] sm:$0xff]
    %v792 = vld [vmem:[%s790 + $0x8] sm:$0xff]
    %v793 = vld [vmem:[%s790 + $0x10] sm:$0xff]
    %v794 = vld [vmem:[%s790 + $0x18] sm:$0xff]
    %s795 = scalar_lea.vmem %s9, 2
    %v796 = vld [vmem:[%s795] sm:$0x1]
    %v798 = vperm.slane %v796, 0
    %800 = vmatpush.msra.mxu0 0.0
    %801 = vmatpush.msra.mxu0 0.0
    %802 = vmatpush.msra.mxu0 0.0
    %803 = vmatpush.msra.mxu0 0.0
    %804 = vmatpush.msra.mxu0 0.0
    %805 = vmatpush.msra.mxu0 0.0
    %806 = vmatpush.msra.mxu0 0.0
    %807 = vmatpush.msra.mxu0 0.0
    %808 = vmatpush.msra.mxu0 0.0
    %809 = vmatpush.msra.mxu0 0.0
    %810 = vmatpush.msra.mxu0 0.0
    %811 = vmatpush.msra.mxu0 0.0
    %812 = vmatpush.msra.mxu0 %v794
    %813 = vmatpush.msra.mxu0 %v793
    %814 = vmatpush.msra.mxu0 %v792
    %815 = vmatpush.msra.mxu0 %v791
    %816 = vmatmul.f32.gmra.mxu0 %v235
    %v817 = vpop.f32.mrf.mxu0
    %v818 = vadd.f32 %v798, %v817
    %819 = vmatmul.f32.gmra.mxu0 %v238
    %v820 = vpop.f32.mrf.mxu0
    %v821 = vadd.f32 %v798, %v820
    %822 = vdwg.mxu0
    %v824 = vsel %vm263, %v755, 0
    %v827 = vsel %vm263, %v785, 0
    %829 = vmatpush.xpose.msra.mxu0 0.0
    %830 = vmatpush.xpose.msra.mxu0 0.0
    %831 = vmatpush.xpose.msra.mxu0 0.0
    %832 = vmatpush.xpose.msra.mxu0 0.0
    %833 = vmatpush.xpose.msra.mxu0 0.0
    %834 = vmatpush.xpose.msra.mxu0 0.0
    %835 = vmatpush.xpose.msra.mxu0 0.0
    %836 = vmatpush.xpose.msra.mxu0 0.0
    %837 = vmatpush.xpose.msra.mxu0 0.0
    %838 = vmatpush.xpose.msra.mxu0 0.0
    %839 = vmatpush.xpose.msra.mxu0 0.0
    %840 = vmatpush.xpose.msra.mxu0 0.0
    %841 = vmatpush.xpose.msra.mxu0 0.0
    %842 = vmatpush.xpose.msra.mxu0 0.0
    %843 = vmatpush.xpose.msra.mxu0 0.0
    %844 = vmatpush.xpose.msra.mxu0 %v827
    %845 = vmatmul.f32.gmra.mxu0 %v824
    %v846 = vpop.f32.mrf.mxu0
    %v847 = vadd.f32 0.0, %v846
    %848 = vdwg.mxu0
    %v850 = vsel %vm263, %v756, 0
    %v853 = vsel %vm263, %v788, 0
    %855 = vmatpush.xpose.msra.mxu0 0.0
    %856 = vmatpush.xpose.msra.mxu0 0.0
    %857 = vmatpush.xpose.msra.mxu0 0.0
    %858 = vmatpush.xpose.msra.mxu0 0.0
    %859 = vmatpush.xpose.msra.mxu0 0.0
    %860 = vmatpush.xpose.msra.mxu0 0.0
    %861 = vmatpush.xpose.msra.mxu0 0.0
    %862 = vmatpush.xpose.msra.mxu0 0.0
    %863 = vmatpush.xpose.msra.mxu0 0.0
    %864 = vmatpush.xpose.msra.mxu0 0.0
    %865 = vmatpush.xpose.msra.mxu0 0.0
    %866 = vmatpush.xpose.msra.mxu0 0.0
    %867 = vmatpush.xpose.msra.mxu0 0.0
    %868 = vmatpush.xpose.msra.mxu0 0.0
    %869 = vmatpush.xpose.msra.mxu0 0.0
    %870 = vmatpush.xpose.msra.mxu0 %v853
    %871 = vmatmul.f32.gmra.mxu0 %v850
    %v872 = vpop.f32.mrf.mxu0
    %v873 = vadd.f32 0.0, %v872
    %874 = vdwg.mxu0
    %v875 = vsel %vm263, %v847, -inf
    %876 = vmax.xlane.f32.xlu0 %v875
    %v877 = vpop.xlane.xlu0 %876
    %v878 = vsel %vm263, %v873, -inf
    %879 = vmax.xlane.f32.xlu0 %v878
    %v880 = vpop.xlane.xlu0 %879
    %v881 = vsub.f32 %v847, %v877
    %v882 = vsub.f32 %v873, %v880
    %v883 = vmul.f32 %v881, 1.442695
    %v884 = vpow.pop %v883
    %v885 = vmul.f32 %v882, 1.442695
    %v886 = vpow.pop %v885
    %v887 = vsel %vm263, %v884, 0.0
    %888 = vadd.xlane.f32.xlu0 %v887
    %v889 = vpop.xlane.xlu0 %888
    %v890 = vsel %vm263, %v886, 0.0
    %891 = vadd.xlane.f32.xlu0 %v890
    %v892 = vpop.xlane.xlu0 %891
    %v893 = vrcp.pop %v889
    %v894 = vmul.f32 %v889, %v893
    %v895 = vsub.f32 1.0, %v894
    %v896 = vmul.f32 %v893, %v895
    %v897 = vadd.f32 %v893, %v896
    %vm898 = vweird.f32 %v889
    %vm899 = vweird.f32 %v893
    %vm900 = vmor %vm898, %vm899
    %v901 = vsel %vm900, %v893, %v897
    %v902 = vand.u32 2147483647, %v889
    %vm903 = vcmp.eq.f32.partialorder %v902, 8.507059e+37
    %v904 = vand.u32 %v889, 2147483648
    %v905 = vor.u32 1.1754944e-38, %v904
    %v906 = vsel %vm903, %v905, %v901
    %v907 = vrcp.pop %v892
    %v908 = vmul.f32 %v892, %v907
    %v909 = vsub.f32 1.0, %v908
    %v910 = vmul.f32 %v907, %v909
    %v911 = vadd.f32 %v907, %v910
    %vm912 = vweird.f32 %v892
    %vm913 = vweird.f32 %v907
    %vm914 = vmor %vm912, %vm913
    %v915 = vsel %vm914, %v907, %v911
    %v916 = vand.u32 2147483647, %v892
    %vm917 = vcmp.eq.f32.partialorder %v916, 8.507059e+37
    %v918 = vand.u32 %v892, 2147483648
    %v919 = vor.u32 1.1754944e-38, %v918
    %v920 = vsel %vm917, %v919, %v915
    %v921 = vmul.f32 %v884, %v906
    %v922 = vmul.f32 %v886, %v920
    %v923 = vadd.f32 %v614, %v921
    %v924 = vadd.f32 %v615, %v922
    %v926 = vsel %vm263, %v921, 0
    %928 = vmatpush.msra.mxu0 0.0
    %929 = vmatpush.msra.mxu0 0.0
    %930 = vmatpush.msra.mxu0 0.0
    %931 = vmatpush.msra.mxu0 0.0
    %932 = vmatpush.msra.mxu0 0.0
    %933 = vmatpush.msra.mxu0 0.0
    %934 = vmatpush.msra.mxu0 0.0
    %935 = vmatpush.msra.mxu0 0.0
    %936 = vmatpush.msra.mxu0 0.0
    %937 = vmatpush.msra.mxu0 0.0
    %938 = vmatpush.msra.mxu0 0.0
    %939 = vmatpush.msra.mxu0 0.0
    %940 = vmatpush.msra.mxu0 0.0
    %941 = vmatpush.msra.mxu0 0.0
    %942 = vmatpush.msra.mxu0 0.0
    %943 = vmatpush.msra.mxu0 %v818
    %944 = vmatmul.f32.gmra.mxu0 %v926
    %v945 = vpop.f32.mrf.mxu0
    %v946 = vadd.f32 0.0, %v945
    %947 = vdwg.mxu0
    %v949 = vsel %vm263, %v922, 0
    %951 = vmatpush.msra.mxu0 0.0
    %952 = vmatpush.msra.mxu0 0.0
    %953 = vmatpush.msra.mxu0 0.0
    %954 = vmatpush.msra.mxu0 0.0
    %955 = vmatpush.msra.mxu0 0.0
    %956 = vmatpush.msra.mxu0 0.0
    %957 = vmatpush.msra.mxu0 0.0
    %958 = vmatpush.msra.mxu0 0.0
    %959 = vmatpush.msra.mxu0 0.0
    %960 = vmatpush.msra.mxu0 0.0
    %961 = vmatpush.msra.mxu0 0.0
    %962 = vmatpush.msra.mxu0 0.0
    %963 = vmatpush.msra.mxu0 0.0
    %964 = vmatpush.msra.mxu0 0.0
    %965 = vmatpush.msra.mxu0 0.0
    %966 = vmatpush.msra.mxu0 %v821
    %967 = vmatmul.f32.gmra.mxu0 %v949
    %v968 = vpop.f32.mrf.mxu0
    %v969 = vadd.f32 0.0, %v968
    %970 = vdwg.mxu0
    %s971 = scalar_lea.vmem %s10, 16
    %v972 = vld [vmem:[%s971] sm:$0xff]
    %v974 = vsel %vm263, %v946, 0
    %v977 = vsel %vm263, %v969, 0
    %979 = vmatpush.msra.mxu0 0.0
    %980 = vmatpush.msra.mxu0 0.0
    %981 = vmatpush.msra.mxu0 0.0
    %982 = vmatpush.msra.mxu0 0.0
    %983 = vmatpush.msra.mxu0 0.0
    %984 = vmatpush.msra.mxu0 0.0
    %985 = vmatpush.msra.mxu0 0.0
    %986 = vmatpush.msra.mxu0 0.0
    %987 = vmatpush.msra.mxu0 0.0
    %988 = vmatpush.msra.mxu0 0.0
    %989 = vmatpush.msra.mxu0 0.0
    %990 = vmatpush.msra.mxu0 0.0
    %991 = vmatpush.msra.mxu0 0.0
    %992 = vmatpush.msra.mxu0 0.0
    %993 = vmatpush.msra.mxu0 0.0
    %994 = vmatpush.msra.mxu0 %v972
    %995 = vmatmul.f32.gmra.mxu0 %v974
    %v996 = vpop.f32.mrf.mxu0
    %v997 = vadd.f32 0.0, %v996
    %998 = vmatmul.f32.gmra.mxu0 %v977
    %v999 = vpop.f32.mrf.mxu0
    %v1000 = vadd.f32 0.0, %v999
    %1001 = vdwg.mxu0
    %v1002 = vadd.f32 %v717, %v997
    %v1003 = vadd.f32 %v720, %v1000
    %s1004 = scalar_lea.vmem %s4, 96
    %v1005 = vld [vmem:[%s1004] sm:$0xff]
    %v1006 = vld [vmem:[%s1004 + $0x8] sm:$0xff]
    %v1007 = vld [vmem:[%s1004 + $0x10] sm:$0xff]
    %v1008 = vld [vmem:[%s1004 + $0x18] sm:$0xff]
    %s1009 = scalar_lea.vmem %s7, 3
    %v1010 = vld [vmem:[%s1009] sm:$0x1]
    %v1012 = vperm.slane %v1010, 0
    %1014 = vmatpush.msra.mxu0 0.0
    %1015 = vmatpush.msra.mxu0 0.0
    %1016 = vmatpush.msra.mxu0 0.0
    %1017 = vmatpush.msra.mxu0 0.0
    %1018 = vmatpush.msra.mxu0 0.0
    %1019 = vmatpush.msra.mxu0 0.0
    %1020 = vmatpush.msra.mxu0 0.0
    %1021 = vmatpush.msra.mxu0 0.0
    %1022 = vmatpush.msra.mxu0 0.0
    %1023 = vmatpush.msra.mxu0 0.0
    %1024 = vmatpush.msra.mxu0 0.0
    %1025 = vmatpush.msra.mxu0 0.0
    %1026 = vmatpush.msra.mxu0 %v1008
    %1027 = vmatpush.msra.mxu0 %v1007
    %1028 = vmatpush.msra.mxu0 %v1006
    %1029 = vmatpush.msra.mxu0 %v1005
    %1030 = vmatmul.f32.gmra.mxu0 %v159
    %v1031 = vpop.f32.mrf.mxu0
    %v1032 = vadd.f32 %v1012, %v1031
    %1033 = vmatmul.f32.gmra.mxu0 %v162
    %v1034 = vpop.f32.mrf.mxu0
    %v1035 = vadd.f32 %v1012, %v1034
    %1036 = vdwg.mxu0
    %v1037 = vmul.f32 %v1032, 0.35355338
    %v1038 = vmul.f32 %v1035, 0.35355338
    %s1039 = scalar_lea.vmem %s5, 96
    %v1040 = vld [vmem:[%s1039] sm:$0xff]
    %v1041 = vld [vmem:[%s1039 + $0x8] sm:$0xff]
    %v1042 = vld [vmem:[%s1039 + $0x10] sm:$0xff]
    %v1043 = vld [vmem:[%s1039 + $0x18] sm:$0xff]
    %s1044 = scalar_lea.vmem %s8, 3
    %v1045 = vld [vmem:[%s1044] sm:$0x1]
    %v1047 = vperm.slane %v1045, 0
    %1049 = vmatpush.msra.mxu0 0.0
    %1050 = vmatpush.msra.mxu0 0.0
    %1051 = vmatpush.msra.mxu0 0.0
    %1052 = vmatpush.msra.mxu0 0.0
    %1053 = vmatpush.msra.mxu0 0.0
    %1054 = vmatpush.msra.mxu0 0.0
    %1055 = vmatpush.msra.mxu0 0.0
    %1056 = vmatpush.msra.mxu0 0.0
    %1057 = vmatpush.msra.mxu0 0.0
    %1058 = vmatpush.msra.mxu0 0.0
    %1059 = vmatpush.msra.mxu0 0.0
    %1060 = vmatpush.msra.mxu0 0.0
    %1061 = vmatpush.msra.mxu0 %v1043
    %1062 = vmatpush.msra.mxu0 %v1042
    %1063 = vmatpush.msra.mxu0 %v1041
    %1064 = vmatpush.msra.mxu0 %v1040
    %1065 = vmatmul.f32.gmra.mxu0 %v198
    %v1066 = vpop.f32.mrf.mxu0
    %v1067 = vadd.f32 %v1047, %v1066
    %1068 = vmatmul.f32.gmra.mxu0 %v201
    %v1069 = vpop.f32.mrf.mxu0
    %v1070 = vadd.f32 %v1047, %v1069
    %1071 = vdwg.mxu0
    %s1072 = scalar_lea.vmem %s6, 96
    %v1073 = vld [vmem:[%s1072] sm:$0xff]
    %v1074 = vld [vmem:[%s1072 + $0x8] sm:$0xff]
    %v1075 = vld [vmem:[%s1072 + $0x10] sm:$0xff]
    %v1076 = vld [vmem:[%s1072 + $0x18] sm:$0xff]
    %s1077 = scalar_lea.vmem %s9, 3
    %v1078 = vld [vmem:[%s1077] sm:$0x1]
    %v1080 = vperm.slane %v1078, 0
    %1082 = vmatpush.msra.mxu0 0.0
    %1083 = vmatpush.msra.mxu0 0.0
    %1084 = vmatpush.msra.mxu0 0.0
    %1085 = vmatpush.msra.mxu0 0.0
    %1086 = vmatpush.msra.mxu0 0.0
    %1087 = vmatpush.msra.mxu0 0.0
    %1088 = vmatpush.msra.mxu0 0.0
    %1089 = vmatpush.msra.mxu0 0.0
    %1090 = vmatpush.msra.mxu0 0.0
    %1091 = vmatpush.msra.mxu0 0.0
    %1092 = vmatpush.msra.mxu0 0.0
    %1093 = vmatpush.msra.mxu0 0.0
    %1094 = vmatpush.msra.mxu0 %v1076
    %1095 = vmatpush.msra.mxu0 %v1075
    %1096 = vmatpush.msra.mxu0 %v1074
    %1097 = vmatpush.msra.mxu0 %v1073
    %1098 = vmatmul.f32.gmra.mxu0 %v235
    %v1099 = vpop.f32.mrf.mxu0
    %v1100 = vadd.f32 %v1080, %v1099
    %1101 = vmatmul.f32.gmra.mxu0 %v238
    %v1102 = vpop.f32.mrf.mxu0
    %v1103 = vadd.f32 %v1080, %v1102
    %1104 = vdwg.mxu0
    %v1106 = vsel %vm263, %v1037, 0
    %v1109 = vsel %vm263, %v1067, 0
    %1111 = vmatpush.xpose.msra.mxu0 0.0
    %1112 = vmatpush.xpose.msra.mxu0 0.0
    %1113 = vmatpush.xpose.msra.mxu0 0.0
    %1114 = vmatpush.xpose.msra.mxu0 0.0
    %1115 = vmatpush.xpose.msra.mxu0 0.0
    %1116 = vmatpush.xpose.msra.mxu0 0.0
    %1117 = vmatpush.xpose.msra.mxu0 0.0
    %1118 = vmatpush.xpose.msra.mxu0 0.0
    %1119 = vmatpush.xpose.msra.mxu0 0.0
    %1120 = vmatpush.xpose.msra.mxu0 0.0
    %1121 = vmatpush.xpose.msra.mxu0 0.0
    %1122 = vmatpush.xpose.msra.mxu0 0.0
    %1123 = vmatpush.xpose.msra.mxu0 0.0
    %1124 = vmatpush.xpose.msra.mxu0 0.0
    %1125 = vmatpush.xpose.msra.mxu0 0.0
    %1126 = vmatpush.xpose.msra.mxu0 %v1109
    %1127 = vmatmul.f32.gmra.mxu0 %v1106
    %v1128 = vpop.f32.mrf.mxu0
    %v1129 = vadd.f32 0.0, %v1128
    %1130 = vdwg.mxu0
    %v1132 = vsel %vm263, %v1038, 0
    %v1135 = vsel %vm263, %v1070, 0
    %1137 = vmatpush.xpose.msra.mxu0 0.0
    %1138 = vmatpush.xpose.msra.mxu0 0.0
    %1139 = vmatpush.xpose.msra.mxu0 0.0
    %1140 = vmatpush.xpose.msra.mxu0 0.0
    %1141 = vmatpush.xpose.msra.mxu0 0.0
    %1142 = vmatpush.xpose.msra.mxu0 0.0
    %1143 = vmatpush.xpose.msra.mxu0 0.0
    %1144 = vmatpush.xpose.msra.mxu0 0.0
    %1145 = vmatpush.xpose.msra.mxu0 0.0
    %1146 = vmatpush.xpose.msra.mxu0 0.0
    %1147 = vmatpush.xpose.msra.mxu0 0.0
    %1148 = vmatpush.xpose.msra.mxu0 0.0
    %1149 = vmatpush.xpose.msra.mxu0 0.0
    %1150 = vmatpush.xpose.msra.mxu0 0.0
    %1151 = vmatpush.xpose.msra.mxu0 0.0
    %1152 = vmatpush.xpose.msra.mxu0 %v1135
    %1153 = vmatmul.f32.gmra.mxu0 %v1132
    %v1154 = vpop.f32.mrf.mxu0
    %v1155 = vadd.f32 0.0, %v1154
    %1156 = vdwg.mxu0
    %v1157 = vsel %vm263, %v1129, -inf
    %1158 = vmax.xlane.f32.xlu0 %v1157
    %v1159 = vpop.xlane.xlu0 %1158
    %v1160 = vsel %vm263, %v1155, -inf
    %1161 = vmax.xlane.f32.xlu0 %v1160
    %v1162 = vpop.xlane.xlu0 %1161
    %v1163 = vsub.f32 %v1129, %v1159
    %v1164 = vsub.f32 %v1155, %v1162
    %v1165 = vmul.f32 %v1163, 1.442695
    %v1166 = vpow.pop %v1165
    %v1167 = vmul.f32 %v1164, 1.442695
    %v1168 = vpow.pop %v1167
    %v1169 = vsel %vm263, %v1166, 0.0
    %1170 = vadd.xlane.f32.xlu0 %v1169
    %v1171 = vpop.xlane.xlu0 %1170
    %v1172 = vsel %vm263, %v1168, 0.0
    %1173 = vadd.xlane.f32.xlu0 %v1172
    %v1174 = vpop.xlane.xlu0 %1173
    %v1175 = vrcp.pop %v1171
    %v1176 = vmul.f32 %v1171, %v1175
    %v1177 = vsub.f32 1.0, %v1176
    %v1178 = vmul.f32 %v1175, %v1177
    %v1179 = vadd.f32 %v1175, %v1178
    %vm1180 = vweird.f32 %v1171
    %vm1181 = vweird.f32 %v1175
    %vm1182 = vmor %vm1180, %vm1181
    %v1183 = vsel %vm1182, %v1175, %v1179
    %v1184 = vand.u32 2147483647, %v1171
    %vm1185 = vcmp.eq.f32.partialorder %v1184, 8.507059e+37
    %v1186 = vand.u32 %v1171, 2147483648
    %v1187 = vor.u32 1.1754944e-38, %v1186
    %v1188 = vsel %vm1185, %v1187, %v1183
    %v1189 = vrcp.pop %v1174
    %v1190 = vmul.f32 %v1174, %v1189
    %v1191 = vsub.f32 1.0, %v1190
    %v1192 = vmul.f32 %v1189, %v1191
    %v1193 = vadd.f32 %v1189, %v1192
    %vm1194 = vweird.f32 %v1174
    %vm1195 = vweird.f32 %v1189
    %vm1196 = vmor %vm1194, %vm1195
    %v1197 = vsel %vm1196, %v1189, %v1193
    %v1198 = vand.u32 2147483647, %v1174
    %vm1199 = vcmp.eq.f32.partialorder %v1198, 8.507059e+37
    %v1200 = vand.u32 %v1174, 2147483648
    %v1201 = vor.u32 1.1754944e-38, %v1200
    %v1202 = vsel %vm1199, %v1201, %v1197
    %v1203 = vmul.f32 %v1166, %v1188
    %v1204 = vmul.f32 %v1168, %v1202
    %v1205 = vadd.f32 %v923, %v1203
    %v1206 = vadd.f32 %v924, %v1204
    %v1208 = vsel %vm263, %v1203, 0
    %1210 = vmatpush.msra.mxu0 0.0
    %1211 = vmatpush.msra.mxu0 0.0
    %1212 = vmatpush.msra.mxu0 0.0
    %1213 = vmatpush.msra.mxu0 0.0
    %1214 = vmatpush.msra.mxu0 0.0
    %1215 = vmatpush.msra.mxu0 0.0
    %1216 = vmatpush.msra.mxu0 0.0
    %1217 = vmatpush.msra.mxu0 0.0
    %1218 = vmatpush.msra.mxu0 0.0
    %1219 = vmatpush.msra.mxu0 0.0
    %1220 = vmatpush.msra.mxu0 0.0
    %1221 = vmatpush.msra.mxu0 0.0
    %1222 = vmatpush.msra.mxu0 0.0
    %1223 = vmatpush.msra.mxu0 0.0
    %1224 = vmatpush.msra.mxu0 0.0
    %1225 = vmatpush.msra.mxu0 %v1100
    %1226 = vmatmul.f32.gmra.mxu0 %v1208
    %v1227 = vpop.f32.mrf.mxu0
    %v1228 = vadd.f32 0.0, %v1227
    %1229 = vdwg.mxu0
    %v1231 = vsel %vm263, %v1204, 0
    %1233 = vmatpush.msra.mxu0 0.0
    %1234 = vmatpush.msra.mxu0 0.0
    %1235 = vmatpush.msra.mxu0 0.0
    %1236 = vmatpush.msra.mxu0 0.0
    %1237 = vmatpush.msra.mxu0 0.0
    %1238 = vmatpush.msra.mxu0 0.0
    %1239 = vmatpush.msra.mxu0 0.0
    %1240 = vmatpush.msra.mxu0 0.0
    %1241 = vmatpush.msra.mxu0 0.0
    %1242 = vmatpush.msra.mxu0 0.0
    %1243 = vmatpush.msra.mxu0 0.0
    %1244 = vmatpush.msra.mxu0 0.0
    %1245 = vmatpush.msra.mxu0 0.0
    %1246 = vmatpush.msra.mxu0 0.0
    %1247 = vmatpush.msra.mxu0 0.0
    %1248 = vmatpush.msra.mxu0 %v1103
    %1249 = vmatmul.f32.gmra.mxu0 %v1231
    %v1250 = vpop.f32.mrf.mxu0
    %v1251 = vadd.f32 0.0, %v1250
    %1252 = vdwg.mxu0
    %s1253 = scalar_lea.vmem %s10, 24
    %v1254 = vld [vmem:[%s1253] sm:$0xff]
    %v1256 = vsel %vm263, %v1228, 0
    %v1259 = vsel %vm263, %v1251, 0
    %1261 = vmatpush.msra.mxu0 0.0
    %1262 = vmatpush.msra.mxu0 0.0
    %1263 = vmatpush.msra.mxu0 0.0
    %1264 = vmatpush.msra.mxu0 0.0
    %1265 = vmatpush.msra.mxu0 0.0
    %1266 = vmatpush.msra.mxu0 0.0
    %1267 = vmatpush.msra.mxu0 0.0
    %1268 = vmatpush.msra.mxu0 0.0
    %1269 = vmatpush.msra.mxu0 0.0
    %1270 = vmatpush.msra.mxu0 0.0
    %1271 = vmatpush.msra.mxu0 0.0
    %1272 = vmatpush.msra.mxu0 0.0
    %1273 = vmatpush.msra.mxu0 0.0
    %1274 = vmatpush.msra.mxu0 0.0
    %1275 = vmatpush.msra.mxu0 0.0
    %1276 = vmatpush.msra.mxu0 %v1254
    %1277 = vmatmul.f32.gmra.mxu0 %v1256
    %v1278 = vpop.f32.mrf.mxu0
    %v1279 = vadd.f32 0.0, %v1278
    %1280 = vmatmul.f32.gmra.mxu0 %v1259
    %v1281 = vpop.f32.mrf.mxu0
    %v1282 = vadd.f32 0.0, %v1281
    %1283 = vdwg.mxu0
    %v1284 = vadd.f32 %v1002, %v1279
    %v1285 = vadd.f32 %v1003, %v1282
    %v1286 = vld [vmem:[%s11] sm:$0x1]
    %v1288 = vperm.slane %v1286, 0
    %v1290 = vadd.f32 %v1284, %v1288
    %v1291 = vadd.f32 %v1285, %v1288
    %v1292 = vadd.f32 %v144, %v1290
    %v1293 = vadd.f32 %v145, %v1291
    %v1294 = vld [vmem:[%s18] sm:$0x1]
    %v1295 = vld [vmem:[%s19] sm:$0x1]
    %v1296 = vsel %vm84, %v1292, 0.0
    %1297 = vadd.xlane.f32.xlu0 %v1296
    %v1298 = vpop.xlane.xlu0 %1297
    %v1299 = vsel %vm84, %v1293, 0.0
    %1300 = vadd.xlane.f32.xlu0 %v1299
    %v1301 = vpop.xlane.xlu0 %1300
    %v1302 = vmul.f32 %v1298, %v97
    %v1303 = vmul.f32 %v1301, %v97
    %v1304 = vsub.f32 %v1292, %v1302
    %v1305 = vsub.f32 %v1293, %v1303
    %v1306 = vmul.f32 %v1304, %v1304
    %v1307 = vmul.f32 %v1305, %v1305
    %v1308 = vsel %vm84, %v1306, 0.0
    %1309 = vadd.xlane.f32.xlu0 %v1308
    %v1310 = vpop.xlane.xlu0 %1309
    %v1311 = vsel %vm84, %v1307, 0.0
    %1312 = vadd.xlane.f32.xlu0 %v1311
    %v1313 = vpop.xlane.xlu0 %1312
    %v1314 = vmul.f32 %v1310, %v97
    %v1315 = vmul.f32 %v1313, %v97
    %v1316 = vadd.f32 %v1314, 1e-05
    %v1317 = vadd.f32 %v1315, 1e-05
    %v1318 = vrsqrt.pop %v1316
    %v1319 = vmul.f32 %v1318, %v1316
    %v1320 = vmul.f32 %v1319, %v1318
    %v1321 = vmul.f32 0.5, %v1320
    %v1322 = vsub.f32 1.5, %v1321
    %v1323 = vmul.f32 %v1318, %v1322
    %vm1324 = vweird.f32 %v1316
    %vm1325 = vweird.f32 %v1318
    %vm1326 = vmor %vm1324, %vm1325
    %v1327 = vsel %vm1326, %v1318, %v1323
    %v1328 = vrsqrt.pop %v1317
    %v1329 = vmul.f32 %v1328, %v1317
    %v1330 = vmul.f32 %v1329, %v1328
    %v1331 = vmul.f32 0.5, %v1330
    %v1332 = vsub.f32 1.5, %v1331
    %v1333 = vmul.f32 %v1328, %v1332
    %vm1334 = vweird.f32 %v1317
    %vm1335 = vweird.f32 %v1328
    %vm1336 = vmor %vm1334, %vm1335
    %v1337 = vsel %vm1336, %v1328, %v1333
    %v1338 = vmul.f32 %v1304, %v1327
    %v1339 = vmul.f32 %v1305, %v1337
    %v1341 = vperm.slane %v1294, 0
    %v1343 = vmul.f32 %v1338, %v1341
    %v1344 = vmul.f32 %v1339, %v1341
    %v1346 = vperm.slane %v1295, 0
    %v1348 = vadd.f32 %v1343, %v1346
    %v1349 = vadd.f32 %v1344, %v1346
    %v1350 = vld [vmem:[%s12] sm:$0xff]
    %v1351 = vld [vmem:[%s12 + $0x8] sm:$0xff]
    %v1352 = vld [vmem:[%s12 + $0x10] sm:$0xff]
    %v1353 = vld [vmem:[%s12 + $0x18] sm:$0xff]
    %v1354 = vld [vmem:[%s13] sm:$0x1]
    %v1356 = vperm.slane %v1354, 0
    %v1359 = vsel %vm84, %v1348, 0
    %v1362 = vsel %vm84, %v1349, 0
    %1364 = vmatpush.msra.mxu0 0.0
    %1365 = vmatpush.msra.mxu0 0.0
    %1366 = vmatpush.msra.mxu0 0.0
    %1367 = vmatpush.msra.mxu0 0.0
    %1368 = vmatpush.msra.mxu0 0.0
    %1369 = vmatpush.msra.mxu0 0.0
    %1370 = vmatpush.msra.mxu0 0.0
    %1371 = vmatpush.msra.mxu0 0.0
    %1372 = vmatpush.msra.mxu0 0.0
    %1373 = vmatpush.msra.mxu0 0.0
    %1374 = vmatpush.msra.mxu0 0.0
    %1375 = vmatpush.msra.mxu0 0.0
    %1376 = vmatpush.msra.mxu0 %v1353
    %1377 = vmatpush.msra.mxu0 %v1352
    %1378 = vmatpush.msra.mxu0 %v1351
    %1379 = vmatpush.msra.mxu0 %v1350
    %1380 = vmatmul.f32.gmra.mxu0 %v1359
    %v1381 = vpop.f32.mrf.mxu0
    %v1382 = vadd.f32 %v1356, %v1381
    %1383 = vmatmul.f32.gmra.mxu0 %v1362
    %v1384 = vpop.f32.mrf.mxu0
    %v1385 = vadd.f32 %v1356, %v1384
    %1386 = vdwg.mxu0
    %v1387 = vmax.f32 %v1382, 0.0
    %v1388 = vmax.f32 %v1385, 0.0
    %v1389 = vld [vmem:[%s14] sm:$0xff]
    %v1390 = vld [vmem:[%s14 + $0x8] sm:$0xff]
    %v1391 = vld [vmem:[%s14 + $0x10] sm:$0xff]
    %v1392 = vld [vmem:[%s14 + $0x18] sm:$0xff]
    %v1393 = vld [vmem:[%s14 + $0x20] sm:$0xff]
    %v1394 = vld [vmem:[%s14 + $0x28] sm:$0xff]
    %v1395 = vld [vmem:[%s14 + $0x30] sm:$0xff]
    %v1396 = vld [vmem:[%s14 + $0x38] sm:$0xff]
    %v1397 = vld [vmem:[%s15] sm:$0x1]
    %v1399 = vperm.slane %v1397, 0
    %vm1401 = vcmask 523264
    %v1403 = vsel %vm1401, %v1387, 0
    %v1406 = vsel %vm1401, %v1388, 0
    %1408 = vmatpush.msra.mxu0 0.0
    %1409 = vmatpush.msra.mxu0 0.0
    %1410 = vmatpush.msra.mxu0 0.0
    %1411 = vmatpush.msra.mxu0 0.0
    %1412 = vmatpush.msra.mxu0 0.0
    %1413 = vmatpush.msra.mxu0 0.0
    %1414 = vmatpush.msra.mxu0 0.0
    %1415 = vmatpush.msra.mxu0 0.0
    %1416 = vmatpush.msra.mxu0 %v1396
    %1417 = vmatpush.msra.mxu0 %v1395
    %1418 = vmatpush.msra.mxu0 %v1394
    %1419 = vmatpush.msra.mxu0 %v1393
    %1420 = vmatpush.msra.mxu0 %v1392
    %1421 = vmatpush.msra.mxu0 %v1391
    %1422 = vmatpush.msra.mxu0 %v1390
    %1423 = vmatpush.msra.mxu0 %v1389
    %1424 = vmatmul.f32.gmra.mxu0 %v1403
    %v1425 = vpop.f32.mrf.mxu0
    %v1426 = vadd.f32 %v1399, %v1425
    %1427 = vmatmul.f32.gmra.mxu0 %v1406
    %v1428 = vpop.f32.mrf.mxu0
    %v1429 = vadd.f32 %v1399, %v1428
    %1430 = vdwg.mxu0
    %v1431 = vadd.f32 %v1348, %v1426
    %v1432 = vadd.f32 %v1349, %v1429
    %v1433 = vld [vmem:[%s20] sm:$0x1]
    %v1434 = vld [vmem:[%s21] sm:$0x1]
    %v1435 = vsel %vm84, %v1431, 0.0
    %1436 = vadd.xlane.f32.xlu0 %v1435
    %v1437 = vpop.xlane.xlu0 %1436
    %v1438 = vsel %vm84, %v1432, 0.0
    %1439 = vadd.xlane.f32.xlu0 %v1438
    %v1440 = vpop.xlane.xlu0 %1439
    %v1441 = vmul.f32 %v1437, %v97
    %v1442 = vmul.f32 %v1440, %v97
    %v1443 = vsub.f32 %v1431, %v1441
    %v1444 = vsub.f32 %v1432, %v1442
    %v1445 = vmul.f32 %v1443, %v1443
    %v1446 = vmul.f32 %v1444, %v1444
    %v1447 = vsel %vm84, %v1445, 0.0
    %1448 = vadd.xlane.f32.xlu0 %v1447
    %v1449 = vpop.xlane.xlu0 %1448
    %v1450 = vsel %vm84, %v1446, 0.0
    %1451 = vadd.xlane.f32.xlu0 %v1450
    %v1452 = vpop.xlane.xlu0 %1451
    %v1453 = vmul.f32 %v1449, %v97
    %v1454 = vmul.f32 %v1452, %v97
    %v1455 = vadd.f32 %v1453, 1e-05
    %v1456 = vadd.f32 %v1454, 1e-05
    %v1457 = vrsqrt.pop %v1455
    %v1458 = vmul.f32 %v1457, %v1455
    %v1459 = vmul.f32 %v1458, %v1457
    %v1460 = vmul.f32 0.5, %v1459
    %v1461 = vsub.f32 1.5, %v1460
    %v1462 = vmul.f32 %v1457, %v1461
    %vm1463 = vweird.f32 %v1455
    %vm1464 = vweird.f32 %v1457
    %vm1465 = vmor %vm1463, %vm1464
    %v1466 = vsel %vm1465, %v1457, %v1462
    %v1467 = vrsqrt.pop %v1456
    %v1468 = vmul.f32 %v1467, %v1456
    %v1469 = vmul.f32 %v1468, %v1467
    %v1470 = vmul.f32 0.5, %v1469
    %v1471 = vsub.f32 1.5, %v1470
    %v1472 = vmul.f32 %v1467, %v1471
    %vm1473 = vweird.f32 %v1456
    %vm1474 = vweird.f32 %v1467
    %vm1475 = vmor %vm1473, %vm1474
    %v1476 = vsel %vm1475, %v1467, %v1472
    %v1477 = vmul.f32 %v1443, %v1466
    %v1478 = vmul.f32 %v1444, %v1476
    %v1480 = vperm.slane %v1433, 0
    %v1482 = vmul.f32 %v1477, %v1480
    %v1483 = vmul.f32 %v1478, %v1480
    %v1485 = vperm.slane %v1434, 0
    %v1487 = vadd.f32 %v1482, %v1485
    %v1488 = vadd.f32 %v1483, %v1485
    %1489 = vst.msk [vmem:[%s22] sm:$0xff] %vm84, %v1487
    %1490 = vst.msk [vmem:[%s22 + $0x8] sm:$0xff] %vm84, %v1488
    %v1491 = vmul.f32 %v1205, 0.25
    %v1492 = vmul.f32 %v1206, 0.25
    %1493 = vst.msk [vmem:[#allocation2] sm:$0xff] %vm263, %v1491
    %1494 = vst.msk [vmem:[#allocation2 + $0x8] sm:$0xff] %vm263, %v1492
    // Predicated region
    $region90: #{transformer_decoder_layer.1} parent=1 // pred_check
      _
    $region91: #{transformer_decoder_layer.1} parent=1 // pred_check_branch
      %1496 = sbr.rel (0) target = $region93
    $region92: #{transformer_decoder_layer.1} parent=1 // pred_region
      _
    $region93: #{transformer_decoder_layer.1} parent=1 // pred_fallthru
      _
    // Predicated region
    $region94: #{transformer_decoder_layer.1} parent=1 // pred_check
      _
    $region95: #{transformer_decoder_layer.1} parent=1 // pred_check_branch
      %1498 = sbr.rel (0) target = $region97
    $region96: #{transformer_decoder_layer.1} parent=1 // pred_region
      %1500 = vsyncadd [#allocation3], 0
      %s1501 = sshll.u32 [#allocation2], 4
      %s1502 = int_to_ptr.vmem [resolvable:$true] %s1501
      %s1503 = sshll.u32 %s23, 4
      %s1504 = int_to_ptr.hbm [resolvable:$true] %s1503
      %1509 = dma.vmem_to_hbm [thread:$0]  %s1502, 256, %s1504, [#allocation3], 128, 128, 8
    $region97: #{transformer_decoder_layer.1} parent=1 // pred_fallthru
      _
    // Predicated region
    $region98: #{transformer_decoder_layer.1} parent=1 // pred_check
      _
    $region99: #{transformer_decoder_layer.1} parent=1 // pred_check_branch
      %1511 = sbr.rel (0) target = $region101
    $region100: #{transformer_decoder_layer.1} parent=1 // pred_region
      _
    $region101: #{transformer_decoder_layer.1} parent=1 // pred_fallthru
      _
    // Predicated region
    $region102: #{transformer_decoder_layer.1} parent=1 // pred_check
      _
    $region103: #{transformer_decoder_layer.1} parent=1 // pred_check_branch
      %1513 = sbr.rel (0) target = $region105
    $region104: #{transformer_decoder_layer.1} parent=1 // pred_region
      %1515 = dma.done [#allocation3], 256
    $region105: #{transformer_decoder_layer.1} parent=1 // pred_fallthru
      _
    %1516 = vsyncpa [#allocation3], 1

</llo_original>
